<compile_context>
chip_gen: v6e
topology: v6e:2x2x1
jax: 0.10.0
libtpu: 0.0.40
codegen_flags: <defaults>
</compile_context>

<pallas_src>
import jax
import jax.numpy as jnp
from jax.experimental import pallas as pl
from jax.experimental.pallas import tpu as pltpu

# ---- model hyperparameters (small, consistent with the module's __init__) ----
VOCAB_SIZE = 50
EMBED_SIZE = 16
KERNEL_SIZES = (3, 4, 5)
NUM_CHANNELS = (8, 8, 8)
NUM_CLASSES = 3
BATCH = 2
SEQ_LEN = 16

LANE = 128     # TPU lane width; channel/class dims zero-padded to this
SUBLANE = 8    # f32 sublane tile; batch is padded to this
V_PAD = 64     # vocab (50) padded to a lane-friendly one-hot width


def _slab_layout(seq_len):
    """Static row offsets of the packed bf16 weight slab (all rows are 128 lanes)."""
    row_wd = seq_len * V_PAD          # decoder weight block (LANE rows)
    row_bp = row_wd + LANE            # conv-bias row (16-row slot, bf16-tile aligned)
    row_bd = row_bp + 16              # decoder-bias row
    n_rows = row_bd + 16
    return row_wd, row_bp, row_bd, n_rows


def _make_kernel(seq_len, row_wd, row_bp, row_bd):
    """Fused forward: relu(onehot @ W_big + b_pool) @ W_dec + b_dec, one VMEM slab."""

    def kernel(tok_ref, slab_ref, out_ref):
        tok = tok_ref[...]                                                # (8, L) int32
        vocab_iota = jax.lax.broadcasted_iota(jnp.int32, (SUBLANE, V_PAD), 1)

        # Embedding gather + conv (all taps/branches) + AdaptiveAvgPool1d(1) as L
        # tiny one-hot MXU matmuls against the prefolded bf16 table.  The (B, t, c)
        # conv activation is never materialized.
        h = jnp.zeros((SUBLANE, LANE), jnp.float32)
        for l in range(seq_len):                                          # static unroll
            onehot = (tok[:, l:l + 1] == vocab_iota).astype(jnp.bfloat16)   # (8, 64)
            w_l = slab_ref[l * V_PAD:(l + 1) * V_PAD, :]                    # (64, 128)
            h = h + jnp.dot(onehot, w_l, preferred_element_type=jnp.float32)

        h = h + slab_ref[row_bp:row_bp + 1, :].astype(jnp.float32)        # + conv biases
        h = jnp.maximum(h, 0.0)                                           # ReLU after pool
        # TODO(synk): train-mode Dropout(0.5) RNG masking not implemented (eval identity).

        w_dec = slab_ref[row_wd:row_wd + LANE, :]                         # (128, 128) bf16
        logits = jnp.dot(h.astype(jnp.bfloat16), w_dec,
                         preferred_element_type=jnp.float32)
        out_ref[...] = logits + slab_ref[row_bd:row_bd + 1, :].astype(jnp.float32)

    return kernel


def prepare_params(params, seq_len=SEQ_LEN):
    """One-time parameter prep (NOT in the per-call path).

    Folds conv taps + AdaptiveAvgPool1d(1) + the combined embedding table + decoder
    into a single lane-padded bf16 slab:

      rows [0, L*V_PAD)        W_big[l, v, c] = sum_e emb2[v, e] * Wp[l, e, c]
      rows [row_wd, +128)      W_dec[c, j] (zero-padded to 128x128)
      row  row_bp              b_pool[c]  (concatenated conv biases)
      row  row_bd              b_dec[j]
    """
    assert VOCAB_SIZE <= V_PAD
    row_wd, row_bp, row_bd, n_rows = _slab_layout(seq_len)
    c_tot = sum(NUM_CHANNELS)

    # Combined embedding table: torch.cat((embedding(x), constant_embedding(x)), dim=2).
    emb2 = jnp.concatenate([params["embedding"], params["constant_embedding"]],
                           axis=1).astype(jnp.float32)                    # (V, 2E)

    # Fold conv + mean-pool:  Wp[l, e, c] = (1/t) * sum_{d : d <= l <= d+t-1} w[c, e, d]
    blocks = []
    for w, k in zip(params["conv_w"], KERNEL_SIZES):                      # w: (c, 2E, k)
        t = seq_len - k + 1
        d = jnp.arange(k)[:, None]
        ls = jnp.arange(seq_len)[None, :]
        win = ((ls >= d) & (ls <= d + t - 1)).astype(jnp.float32)         # (k, L)
        blocks.append(jnp.einsum("dl,oed->leo", win, w.astype(jnp.float32)) / t)
    w_pool = jnp.concatenate(blocks, axis=2)                              # (L, 2E, c_tot)

    # Fold the embedding gather into the same weights.
    w_big = jnp.einsum("ve,lec->lvc", emb2, w_pool)                       # (L, V, c_tot)

    b_pool = jnp.concatenate([b.astype(jnp.float32) for b in params["conv_b"]])
    w_dec = params["dec_w"].astype(jnp.float32).T                         # (c_tot, 3)
    b_dec = params["dec_b"].astype(jnp.float32)

    wbig_pad = jnp.zeros((seq_len, V_PAD, LANE), jnp.float32)
    wbig_pad = wbig_pad.at[:, :VOCAB_SIZE, :c_tot].set(w_big)

    slab = jnp.zeros((n_rows, LANE), jnp.float32)
    slab = slab.at[0:seq_len * V_PAD, :].set(wbig_pad.reshape(seq_len * V_PAD, LANE))
    slab = slab.at[row_wd:row_wd + c_tot, :NUM_CLASSES].set(w_dec)
    slab = slab.at[row_bp, :c_tot].set(b_pool)
    slab = slab.at[row_bd, :NUM_CLASSES].set(b_dec)
    return slab.astype(jnp.bfloat16)                                      # halve DMA bytes


def textcnn_forward(tokens, slab):
    bsz, seq_len = tokens.shape
    # TODO(synk): for bsz > 8 add a batch grid (dimension_semantics=("parallel",)).
    assert bsz <= SUBLANE
    row_wd, row_bp, row_bd, n_rows = _slab_layout(seq_len)
    assert slab.shape == (n_rows, LANE)

    # Pad batch to 8 sublanes so all vreg loads/stores are unmasked.
    tok_pad = jnp.zeros((SUBLANE, seq_len), jnp.int32).at[:bsz].set(tokens.astype(jnp.int32))

    out_pad = pl.pallas_call(
        _make_kernel(seq_len, row_wd, row_bp, row_bd),
        out_shape=jax.ShapeDtypeStruct((SUBLANE, LANE), jnp.float32),     # lane-dense tile
        in_specs=[pl.BlockSpec(memory_space=pltpu.MemorySpace.VMEM),
                  pl.BlockSpec(memory_space=pltpu.MemorySpace.VMEM)],
        out_specs=pl.BlockSpec(memory_space=pltpu.MemorySpace.VMEM),
    )(tok_pad, slab)

    # If this feeds further device compute, return out_pad and let the consumer slice
    # (padded lanes are exact zeros).  Sliced here for the standalone test.
    return out_pad[:bsz, :NUM_CLASSES]                                    # (B, 3)


def reference_forward(tokens, params):
    """Pure-JAX f32 reference mirroring the PyTorch forward (NCW conv layout)."""
    emb = jnp.take(params["embedding"], tokens, axis=0)
    cemb = jnp.take(params["constant_embedding"], tokens, axis=0)
    x = jnp.concatenate([emb, cemb], axis=-1).transpose(0, 2, 1)          # (B, 2E, L)
    feats = []
    for w, b in zip(params["conv_w"], params["conv_b"]):
        y = jax.lax.conv_general_dilated(
            x, w, window_strides=(1,), padding="VALID",
            dimension_numbers=("NCH", "OIH", "NCH")) + b[None, :, None]
        pooled = jnp.mean(y, axis=-1)                                     # pool -> squeeze
        feats.append(jnp.maximum(pooled, 0.0))                            # relu after pool
    enc = jnp.concatenate(feats, axis=1)
    return enc @ params["dec_w"].T + params["dec_b"]


def init_params(key):
    ks = jax.random.split(key, 4 + 2 * len(KERNEL_SIZES))
    params = {
        "embedding": jax.random.normal(ks[0], (VOCAB_SIZE, EMBED_SIZE), jnp.float32) * 0.1,
        "constant_embedding": jax.random.normal(ks[1], (VOCAB_SIZE, EMBED_SIZE), jnp.float32) * 0.1,
        "dec_w": jax.random.normal(ks[2], (NUM_CLASSES, sum(NUM_CHANNELS)), jnp.float32) * 0.1,
        "dec_b": jax.random.normal(ks[3], (NUM_CLASSES,), jnp.float32) * 0.1,
        "conv_w": [],
        "conv_b": [],
    }
    for i, (c, k) in enumerate(zip(NUM_CHANNELS, KERNEL_SIZES)):
        params["conv_w"].append(
            jax.random.normal(ks[4 + 2 * i], (c, 2 * EMBED_SIZE, k), jnp.float32) * 0.1)
        params["conv_b"].append(
            jax.random.normal(ks[5 + 2 * i], (c,), jnp.float32) * 0.1)
    return params


if __name__ == "__main__":
    root = jax.random.PRNGKey(0)
    k_params, k_tok = jax.random.split(root)
    params = init_params(k_params)
    tokens = jax.random.randint(k_tok, (BATCH, SEQ_LEN), 0, VOCAB_SIZE, dtype=jnp.int32)

    # One-time parameter prep (hoisted out of the call path).
    slab = jax.block_until_ready(prepare_params(params, SEQ_LEN))

    out = jax.jit(textcnn_forward)(tokens, slab)
    out = jax.block_until_ready(out)

    ref = reference_forward(tokens, params)
    assert out.shape == (BATCH, NUM_CLASSES), out.shape
    # bf16 weight slab with f32 accumulation: tolerance relaxed vs. the f32 reference.
    assert jnp.allclose(out, ref, atol=2e-2, rtol=2e-2), (out, ref)
    print("KERNEL_OK")
</pallas_src>

<mosaic_0001>
module attributes {stable_mosaic.version = 11 : i64} {
  func.func @kernel(%arg0: memref<8x16xi32, #tpu.memory_space<vmem>>, %arg1: memref<1184x128xbf16, #tpu.memory_space<vmem>>, %arg2: memref<8x128xf32, #tpu.memory_space<vmem>>) attributes {dimension_semantics = [], scalar_prefetch = 0 : i64, scratch_operands = 0 : i64, tpu.core_type = #tpu.core_type<tc>} {
    %c0 = arith.constant 0 : index
    %c0_0 = arith.constant 0 : index
    %0 = vector.load %arg0[%c0, %c0_0] : memref<8x16xi32, #tpu.memory_space<vmem>>, vector<8x16xi32>
    %1 = tpu.iota {dimensions = array<i32: 1>} : vector<8x64xi32>
    %cst = arith.constant 0.000000e+00 : f32
    %2 = vector.broadcast %cst : f32 to vector<8x128xf32>
    %3 = vector.extract_strided_slice %0 {offsets = [0, 0], sizes = [8, 1], strides = [1, 1]} : vector<8x16xi32> to vector<8x1xi32>
    %4 = vector.broadcast %3 : vector<8x1xi32> to vector<8x64xi32>
    %5 = arith.cmpi eq, %4, %1 : vector<8x64xi32>
    %6 = arith.extui %5 : vector<8x64xi1> to vector<8x64xi32>
    %7 = arith.sitofp %6 : vector<8x64xi32> to vector<8x64xf32>
    %8 = arith.truncf %7 : vector<8x64xf32> to vector<8x64xbf16>
    %c0_1 = arith.constant 0 : index
    %c0_2 = arith.constant 0 : index
    %9 = vector.load %arg1[%c0_1, %c0_2] : memref<1184x128xbf16, #tpu.memory_space<vmem>>, vector<64x128xbf16>
    %cst_3 = arith.constant dense<0.000000e+00> : vector<8x128xf32>
    %10 = tpu.matmul %8, %9, %cst_3 {dimension_numbers = #tpu.dot_dimension_numbers<[1], [0], [0], [1], [0, 0, 1, 1], [], []>} : vector<8x64xbf16>, vector<64x128xbf16>, vector<8x128xf32> -> vector<8x128xf32>
    %11 = arith.addf %2, %10 : vector<8x128xf32>
    %12 = vector.extract_strided_slice %0 {offsets = [0, 1], sizes = [8, 1], strides = [1, 1]} : vector<8x16xi32> to vector<8x1xi32>
    %13 = vector.broadcast %12 : vector<8x1xi32> to vector<8x64xi32>
    %14 = arith.cmpi eq, %13, %1 : vector<8x64xi32>
    %15 = arith.extui %14 : vector<8x64xi1> to vector<8x64xi32>
    %16 = arith.sitofp %15 : vector<8x64xi32> to vector<8x64xf32>
    %17 = arith.truncf %16 : vector<8x64xf32> to vector<8x64xbf16>
    %c64 = arith.constant 64 : index
    %c0_4 = arith.constant 0 : index
    %18 = vector.load %arg1[%c64, %c0_4] : memref<1184x128xbf16, #tpu.memory_space<vmem>>, vector<64x128xbf16>
    %cst_5 = arith.constant dense<0.000000e+00> : vector<8x128xf32>
    %19 = tpu.matmul %17, %18, %cst_5 {dimension_numbers = #tpu.dot_dimension_numbers<[1], [0], [0], [1], [0, 0, 1, 1], [], []>} : vector<8x64xbf16>, vector<64x128xbf16>, vector<8x128xf32> -> vector<8x128xf32>
    %20 = arith.addf %11, %19 : vector<8x128xf32>
    %21 = vector.extract_strided_slice %0 {offsets = [0, 2], sizes = [8, 1], strides = [1, 1]} : vector<8x16xi32> to vector<8x1xi32>
    %22 = vector.broadcast %21 : vector<8x1xi32> to vector<8x64xi32>
    %23 = arith.cmpi eq, %22, %1 : vector<8x64xi32>
    %24 = arith.extui %23 : vector<8x64xi1> to vector<8x64xi32>
    %25 = arith.sitofp %24 : vector<8x64xi32> to vector<8x64xf32>
    %26 = arith.truncf %25 : vector<8x64xf32> to vector<8x64xbf16>
    %c128 = arith.constant 128 : index
    %c0_6 = arith.constant 0 : index
    %27 = vector.load %arg1[%c128, %c0_6] : memref<1184x128xbf16, #tpu.memory_space<vmem>>, vector<64x128xbf16>
    %cst_7 = arith.constant dense<0.000000e+00> : vector<8x128xf32>
    %28 = tpu.matmul %26, %27, %cst_7 {dimension_numbers = #tpu.dot_dimension_numbers<[1], [0], [0], [1], [0, 0, 1, 1], [], []>} : vector<8x64xbf16>, vector<64x128xbf16>, vector<8x128xf32> -> vector<8x128xf32>
    %29 = arith.addf %20, %28 : vector<8x128xf32>
    %30 = vector.extract_strided_slice %0 {offsets = [0, 3], sizes = [8, 1], strides = [1, 1]} : vector<8x16xi32> to vector<8x1xi32>
    %31 = vector.broadcast %30 : vector<8x1xi32> to vector<8x64xi32>
    %32 = arith.cmpi eq, %31, %1 : vector<8x64xi32>
    %33 = arith.extui %32 : vector<8x64xi1> to vector<8x64xi32>
    %34 = arith.sitofp %33 : vector<8x64xi32> to vector<8x64xf32>
    %35 = arith.truncf %34 : vector<8x64xf32> to vector<8x64xbf16>
    %c192 = arith.constant 192 : index
    %c0_8 = arith.constant 0 : index
    %36 = vector.load %arg1[%c192, %c0_8] : memref<1184x128xbf16, #tpu.memory_space<vmem>>, vector<64x128xbf16>
    %cst_9 = arith.constant dense<0.000000e+00> : vector<8x128xf32>
    %37 = tpu.matmul %35, %36, %cst_9 {dimension_numbers = #tpu.dot_dimension_numbers<[1], [0], [0], [1], [0, 0, 1, 1], [], []>} : vector<8x64xbf16>, vector<64x128xbf16>, vector<8x128xf32> -> vector<8x128xf32>
    %38 = arith.addf %29, %37 : vector<8x128xf32>
    %39 = vector.extract_strided_slice %0 {offsets = [0, 4], sizes = [8, 1], strides = [1, 1]} : vector<8x16xi32> to vector<8x1xi32>
    %40 = vector.broadcast %39 : vector<8x1xi32> to vector<8x64xi32>
    %41 = arith.cmpi eq, %40, %1 : vector<8x64xi32>
    %42 = arith.extui %41 : vector<8x64xi1> to vector<8x64xi32>
    %43 = arith.sitofp %42 : vector<8x64xi32> to vector<8x64xf32>
    %44 = arith.truncf %43 : vector<8x64xf32> to vector<8x64xbf16>
    %c256 = arith.constant 256 : index
    %c0_10 = arith.constant 0 : index
    %45 = vector.load %arg1[%c256, %c0_10] : memref<1184x128xbf16, #tpu.memory_space<vmem>>, vector<64x128xbf16>
    %cst_11 = arith.constant dense<0.000000e+00> : vector<8x128xf32>
    %46 = tpu.matmul %44, %45, %cst_11 {dimension_numbers = #tpu.dot_dimension_numbers<[1], [0], [0], [1], [0, 0, 1, 1], [], []>} : vector<8x64xbf16>, vector<64x128xbf16>, vector<8x128xf32> -> vector<8x128xf32>
    %47 = arith.addf %38, %46 : vector<8x128xf32>
    %48 = vector.extract_strided_slice %0 {offsets = [0, 5], sizes = [8, 1], strides = [1, 1]} : vector<8x16xi32> to vector<8x1xi32>
    %49 = vector.broadcast %48 : vector<8x1xi32> to vector<8x64xi32>
    %50 = arith.cmpi eq, %49, %1 : vector<8x64xi32>
    %51 = arith.extui %50 : vector<8x64xi1> to vector<8x64xi32>
    %52 = arith.sitofp %51 : vector<8x64xi32> to vector<8x64xf32>
    %53 = arith.truncf %52 : vector<8x64xf32> to vector<8x64xbf16>
    %c320 = arith.constant 320 : index
    %c0_12 = arith.constant 0 : index
    %54 = vector.load %arg1[%c320, %c0_12] : memref<1184x128xbf16, #tpu.memory_space<vmem>>, vector<64x128xbf16>
    %cst_13 = arith.constant dense<0.000000e+00> : vector<8x128xf32>
    %55 = tpu.matmul %53, %54, %cst_13 {dimension_numbers = #tpu.dot_dimension_numbers<[1], [0], [0], [1], [0, 0, 1, 1], [], []>} : vector<8x64xbf16>, vector<64x128xbf16>, vector<8x128xf32> -> vector<8x128xf32>
    %56 = arith.addf %47, %55 : vector<8x128xf32>
    %57 = vector.extract_strided_slice %0 {offsets = [0, 6], sizes = [8, 1], strides = [1, 1]} : vector<8x16xi32> to vector<8x1xi32>
    %58 = vector.broadcast %57 : vector<8x1xi32> to vector<8x64xi32>
    %59 = arith.cmpi eq, %58, %1 : vector<8x64xi32>
    %60 = arith.extui %59 : vector<8x64xi1> to vector<8x64xi32>
    %61 = arith.sitofp %60 : vector<8x64xi32> to vector<8x64xf32>
    %62 = arith.truncf %61 : vector<8x64xf32> to vector<8x64xbf16>
    %c384 = arith.constant 384 : index
    %c0_14 = arith.constant 0 : index
    %63 = vector.load %arg1[%c384, %c0_14] : memref<1184x128xbf16, #tpu.memory_space<vmem>>, vector<64x128xbf16>
    %cst_15 = arith.constant dense<0.000000e+00> : vector<8x128xf32>
    %64 = tpu.matmul %62, %63, %cst_15 {dimension_numbers = #tpu.dot_dimension_numbers<[1], [0], [0], [1], [0, 0, 1, 1], [], []>} : vector<8x64xbf16>, vector<64x128xbf16>, vector<8x128xf32> -> vector<8x128xf32>
    %65 = arith.addf %56, %64 : vector<8x128xf32>
    %66 = vector.extract_strided_slice %0 {offsets = [0, 7], sizes = [8, 1], strides = [1, 1]} : vector<8x16xi32> to vector<8x1xi32>
    %67 = vector.broadcast %66 : vector<8x1xi32> to vector<8x64xi32>
    %68 = arith.cmpi eq, %67, %1 : vector<8x64xi32>
    %69 = arith.extui %68 : vector<8x64xi1> to vector<8x64xi32>
    %70 = arith.sitofp %69 : vector<8x64xi32> to vector<8x64xf32>
    %71 = arith.truncf %70 : vector<8x64xf32> to vector<8x64xbf16>
    %c448 = arith.constant 448 : index
    %c0_16 = arith.constant 0 : index
    %72 = vector.load %arg1[%c448, %c0_16] : memref<1184x128xbf16, #tpu.memory_space<vmem>>, vector<64x128xbf16>
    %cst_17 = arith.constant dense<0.000000e+00> : vector<8x128xf32>
    %73 = tpu.matmul %71, %72, %cst_17 {dimension_numbers = #tpu.dot_dimension_numbers<[1], [0], [0], [1], [0, 0, 1, 1], [], []>} : vector<8x64xbf16>, vector<64x128xbf16>, vector<8x128xf32> -> vector<8x128xf32>
    %74 = arith.addf %65, %73 : vector<8x128xf32>
    %75 = vector.extract_strided_slice %0 {offsets = [0, 8], sizes = [8, 1], strides = [1, 1]} : vector<8x16xi32> to vector<8x1xi32>
    %76 = vector.broadcast %75 : vector<8x1xi32> to vector<8x64xi32>
    %77 = arith.cmpi eq, %76, %1 : vector<8x64xi32>
    %78 = arith.extui %77 : vector<8x64xi1> to vector<8x64xi32>
    %79 = arith.sitofp %78 : vector<8x64xi32> to vector<8x64xf32>
    %80 = arith.truncf %79 : vector<8x64xf32> to vector<8x64xbf16>
    %c512 = arith.constant 512 : index
    %c0_18 = arith.constant 0 : index
    %81 = vector.load %arg1[%c512, %c0_18] : memref<1184x128xbf16, #tpu.memory_space<vmem>>, vector<64x128xbf16>
    %cst_19 = arith.constant dense<0.000000e+00> : vector<8x128xf32>
    %82 = tpu.matmul %80, %81, %cst_19 {dimension_numbers = #tpu.dot_dimension_numbers<[1], [0], [0], [1], [0, 0, 1, 1], [], []>} : vector<8x64xbf16>, vector<64x128xbf16>, vector<8x128xf32> -> vector<8x128xf32>
    %83 = arith.addf %74, %82 : vector<8x128xf32>
    %84 = vector.extract_strided_slice %0 {offsets = [0, 9], sizes = [8, 1], strides = [1, 1]} : vector<8x16xi32> to vector<8x1xi32>
    %85 = vector.broadcast %84 : vector<8x1xi32> to vector<8x64xi32>
    %86 = arith.cmpi eq, %85, %1 : vector<8x64xi32>
    %87 = arith.extui %86 : vector<8x64xi1> to vector<8x64xi32>
    %88 = arith.sitofp %87 : vector<8x64xi32> to vector<8x64xf32>
    %89 = arith.truncf %88 : vector<8x64xf32> to vector<8x64xbf16>
    %c576 = arith.constant 576 : index
    %c0_20 = arith.constant 0 : index
    %90 = vector.load %arg1[%c576, %c0_20] : memref<1184x128xbf16, #tpu.memory_space<vmem>>, vector<64x128xbf16>
    %cst_21 = arith.constant dense<0.000000e+00> : vector<8x128xf32>
    %91 = tpu.matmul %89, %90, %cst_21 {dimension_numbers = #tpu.dot_dimension_numbers<[1], [0], [0], [1], [0, 0, 1, 1], [], []>} : vector<8x64xbf16>, vector<64x128xbf16>, vector<8x128xf32> -> vector<8x128xf32>
    %92 = arith.addf %83, %91 : vector<8x128xf32>
    %93 = vector.extract_strided_slice %0 {offsets = [0, 10], sizes = [8, 1], strides = [1, 1]} : vector<8x16xi32> to vector<8x1xi32>
    %94 = vector.broadcast %93 : vector<8x1xi32> to vector<8x64xi32>
    %95 = arith.cmpi eq, %94, %1 : vector<8x64xi32>
    %96 = arith.extui %95 : vector<8x64xi1> to vector<8x64xi32>
    %97 = arith.sitofp %96 : vector<8x64xi32> to vector<8x64xf32>
    %98 = arith.truncf %97 : vector<8x64xf32> to vector<8x64xbf16>
    %c640 = arith.constant 640 : index
    %c0_22 = arith.constant 0 : index
    %99 = vector.load %arg1[%c640, %c0_22] : memref<1184x128xbf16, #tpu.memory_space<vmem>>, vector<64x128xbf16>
    %cst_23 = arith.constant dense<0.000000e+00> : vector<8x128xf32>
    %100 = tpu.matmul %98, %99, %cst_23 {dimension_numbers = #tpu.dot_dimension_numbers<[1], [0], [0], [1], [0, 0, 1, 1], [], []>} : vector<8x64xbf16>, vector<64x128xbf16>, vector<8x128xf32> -> vector<8x128xf32>
    %101 = arith.addf %92, %100 : vector<8x128xf32>
    %102 = vector.extract_strided_slice %0 {offsets = [0, 11], sizes = [8, 1], strides = [1, 1]} : vector<8x16xi32> to vector<8x1xi32>
    %103 = vector.broadcast %102 : vector<8x1xi32> to vector<8x64xi32>
    %104 = arith.cmpi eq, %103, %1 : vector<8x64xi32>
    %105 = arith.extui %104 : vector<8x64xi1> to vector<8x64xi32>
    %106 = arith.sitofp %105 : vector<8x64xi32> to vector<8x64xf32>
    %107 = arith.truncf %106 : vector<8x64xf32> to vector<8x64xbf16>
    %c704 = arith.constant 704 : index
    %c0_24 = arith.constant 0 : index
    %108 = vector.load %arg1[%c704, %c0_24] : memref<1184x128xbf16, #tpu.memory_space<vmem>>, vector<64x128xbf16>
    %cst_25 = arith.constant dense<0.000000e+00> : vector<8x128xf32>
    %109 = tpu.matmul %107, %108, %cst_25 {dimension_numbers = #tpu.dot_dimension_numbers<[1], [0], [0], [1], [0, 0, 1, 1], [], []>} : vector<8x64xbf16>, vector<64x128xbf16>, vector<8x128xf32> -> vector<8x128xf32>
    %110 = arith.addf %101, %109 : vector<8x128xf32>
    %111 = vector.extract_strided_slice %0 {offsets = [0, 12], sizes = [8, 1], strides = [1, 1]} : vector<8x16xi32> to vector<8x1xi32>
    %112 = vector.broadcast %111 : vector<8x1xi32> to vector<8x64xi32>
    %113 = arith.cmpi eq, %112, %1 : vector<8x64xi32>
    %114 = arith.extui %113 : vector<8x64xi1> to vector<8x64xi32>
    %115 = arith.sitofp %114 : vector<8x64xi32> to vector<8x64xf32>
    %116 = arith.truncf %115 : vector<8x64xf32> to vector<8x64xbf16>
    %c768 = arith.constant 768 : index
    %c0_26 = arith.constant 0 : index
    %117 = vector.load %arg1[%c768, %c0_26] : memref<1184x128xbf16, #tpu.memory_space<vmem>>, vector<64x128xbf16>
    %cst_27 = arith.constant dense<0.000000e+00> : vector<8x128xf32>
    %118 = tpu.matmul %116, %117, %cst_27 {dimension_numbers = #tpu.dot_dimension_numbers<[1], [0], [0], [1], [0, 0, 1, 1], [], []>} : vector<8x64xbf16>, vector<64x128xbf16>, vector<8x128xf32> -> vector<8x128xf32>
    %119 = arith.addf %110, %118 : vector<8x128xf32>
    %120 = vector.extract_strided_slice %0 {offsets = [0, 13], sizes = [8, 1], strides = [1, 1]} : vector<8x16xi32> to vector<8x1xi32>
    %121 = vector.broadcast %120 : vector<8x1xi32> to vector<8x64xi32>
    %122 = arith.cmpi eq, %121, %1 : vector<8x64xi32>
    %123 = arith.extui %122 : vector<8x64xi1> to vector<8x64xi32>
    %124 = arith.sitofp %123 : vector<8x64xi32> to vector<8x64xf32>
    %125 = arith.truncf %124 : vector<8x64xf32> to vector<8x64xbf16>
    %c832 = arith.constant 832 : index
    %c0_28 = arith.constant 0 : index
    %126 = vector.load %arg1[%c832, %c0_28] : memref<1184x128xbf16, #tpu.memory_space<vmem>>, vector<64x128xbf16>
    %cst_29 = arith.constant dense<0.000000e+00> : vector<8x128xf32>
    %127 = tpu.matmul %125, %126, %cst_29 {dimension_numbers = #tpu.dot_dimension_numbers<[1], [0], [0], [1], [0, 0, 1, 1], [], []>} : vector<8x64xbf16>, vector<64x128xbf16>, vector<8x128xf32> -> vector<8x128xf32>
    %128 = arith.addf %119, %127 : vector<8x128xf32>
    %129 = vector.extract_strided_slice %0 {offsets = [0, 14], sizes = [8, 1], strides = [1, 1]} : vector<8x16xi32> to vector<8x1xi32>
    %130 = vector.broadcast %129 : vector<8x1xi32> to vector<8x64xi32>
    %131 = arith.cmpi eq, %130, %1 : vector<8x64xi32>
    %132 = arith.extui %131 : vector<8x64xi1> to vector<8x64xi32>
    %133 = arith.sitofp %132 : vector<8x64xi32> to vector<8x64xf32>
    %134 = arith.truncf %133 : vector<8x64xf32> to vector<8x64xbf16>
    %c896 = arith.constant 896 : index
    %c0_30 = arith.constant 0 : index
    %135 = vector.load %arg1[%c896, %c0_30] : memref<1184x128xbf16, #tpu.memory_space<vmem>>, vector<64x128xbf16>
    %cst_31 = arith.constant dense<0.000000e+00> : vector<8x128xf32>
    %136 = tpu.matmul %134, %135, %cst_31 {dimension_numbers = #tpu.dot_dimension_numbers<[1], [0], [0], [1], [0, 0, 1, 1], [], []>} : vector<8x64xbf16>, vector<64x128xbf16>, vector<8x128xf32> -> vector<8x128xf32>
    %137 = arith.addf %128, %136 : vector<8x128xf32>
    %138 = vector.extract_strided_slice %0 {offsets = [0, 15], sizes = [8, 1], strides = [1, 1]} : vector<8x16xi32> to vector<8x1xi32>
    %139 = vector.broadcast %138 : vector<8x1xi32> to vector<8x64xi32>
    %140 = arith.cmpi eq, %139, %1 : vector<8x64xi32>
    %141 = arith.extui %140 : vector<8x64xi1> to vector<8x64xi32>
    %142 = arith.sitofp %141 : vector<8x64xi32> to vector<8x64xf32>
    %143 = arith.truncf %142 : vector<8x64xf32> to vector<8x64xbf16>
    %c960 = arith.constant 960 : index
    %c0_32 = arith.constant 0 : index
    %144 = vector.load %arg1[%c960, %c0_32] : memref<1184x128xbf16, #tpu.memory_space<vmem>>, vector<64x128xbf16>
    %cst_33 = arith.constant dense<0.000000e+00> : vector<8x128xf32>
    %145 = tpu.matmul %143, %144, %cst_33 {dimension_numbers = #tpu.dot_dimension_numbers<[1], [0], [0], [1], [0, 0, 1, 1], [], []>} : vector<8x64xbf16>, vector<64x128xbf16>, vector<8x128xf32> -> vector<8x128xf32>
    %146 = arith.addf %137, %145 : vector<8x128xf32>
    %c1152 = arith.constant 1152 : index
    %c0_34 = arith.constant 0 : index
    %147 = vector.load %arg1[%c1152, %c0_34] : memref<1184x128xbf16, #tpu.memory_space<vmem>>, vector<1x128xbf16>
    %148 = arith.extf %147 : vector<1x128xbf16> to vector<1x128xf32>
    %149 = vector.broadcast %148 : vector<1x128xf32> to vector<8x128xf32>
    %150 = arith.addf %146, %149 : vector<8x128xf32>
    %cst_35 = arith.constant 0.000000e+00 : f32
    %151 = vector.broadcast %cst_35 : f32 to vector<8x128xf32>
    %152 = arith.maximumf %150, %151 : vector<8x128xf32>
    %c1024 = arith.constant 1024 : index
    %c0_36 = arith.constant 0 : index
    %153 = vector.load %arg1[%c1024, %c0_36] : memref<1184x128xbf16, #tpu.memory_space<vmem>>, vector<128x128xbf16>
    %154 = arith.truncf %152 : vector<8x128xf32> to vector<8x128xbf16>
    %cst_37 = arith.constant dense<0.000000e+00> : vector<8x128xf32>
    %155 = tpu.matmul %154, %153, %cst_37 {dimension_numbers = #tpu.dot_dimension_numbers<[1], [0], [0], [1], [0, 0, 1, 1], [], []>} : vector<8x128xbf16>, vector<128x128xbf16>, vector<8x128xf32> -> vector<8x128xf32>
    %c1168 = arith.constant 1168 : index
    %c0_38 = arith.constant 0 : index
    %156 = vector.load %arg1[%c1168, %c0_38] : memref<1184x128xbf16, #tpu.memory_space<vmem>>, vector<1x128xbf16>
    %157 = arith.extf %156 : vector<1x128xbf16> to vector<1x128xf32>
    %158 = vector.broadcast %157 : vector<1x128xf32> to vector<8x128xf32>
    %159 = arith.addf %155, %158 : vector<8x128xf32>
    %c0_39 = arith.constant 0 : index
    %c0_40 = arith.constant 0 : index
    %160 = vector.load %arg2[%c0_39, %c0_40] : memref<8x128xf32, #tpu.memory_space<vmem>>, vector<8x128xf32>
    tpu.vector_store %arg2[%c0_39, %c0_40], %159 {strides = array<i32>} : memref<8x128xf32, #tpu.memory_space<vmem>>, vector<8x128xf32>,
    return
  }
}

</mosaic_0001>

<llo_original>
// kernel: textcnn_forward.1
$region0: #{textcnn_forward.1}
  #allocation0 [shape = 'u32[]', space=smem, size = 0x4, offset = 0x4, fixed_abs, tag = 'smem constant byte address 0x4 - core index']
  #allocation1 [shape = 'u32[144,128]{1,0:T(1,128)}', space=vmem, size = 0x12000, scoped, tag = 'internal scratch']
  %s0 = inlined_call_operand.vmem [shape: s32[8,16], index: 0, kind: input, shape index: {}]
  %s1 = inlined_call_operand.hbm [shape: bf16[1184,128], index: 1, kind: input, shape index: {}]
  %s2 = inlined_call_operand.vmem [shape: f32[8,128], index: 2, kind: output, shape index: {}]
  %s3 = sld [smem:[#allocation0]]
  $region22: #{textcnn_forward.1} parent=0
    _
  %s5 = ssub.s32 1, %s3
  %s6 = scalar_select 0, %s5, %s3
  $region1: #{textcnn_forward.1} parent=0
    #allocation2 [shape = 'u8[303104]{0}', space=vmem, size = 0x4a000, scoped, tag = 'input window, operand 1, single buffered']
    #allocation3 [shape = 's32[1]{0}', space=sflag, size = 0x4, scoped, tag = 'scoped memory for textcnn_forward.1']
    %7 = vsyncpa [#allocation3], 0
    // Predicated region
    $region2: #{textcnn_forward.1} parent=1 // pred_check
      _
    $region3: #{textcnn_forward.1} parent=1 // pred_check_branch
      %9 = sbr.rel (0) target = $region5
    $region4: #{textcnn_forward.1} parent=1 // pred_region
      _
    $region5: #{textcnn_forward.1} parent=1 // pred_fallthru
      _
    // Predicated region
    $region6: #{textcnn_forward.1} parent=1 // pred_check
      _
    $region7: #{textcnn_forward.1} parent=1 // pred_check_branch
      %11 = sbr.rel (0) target = $region9
    $region8: #{textcnn_forward.1} parent=1 // pred_region
      %s13 = ssub.s32 9472, 9472
      %14 = vsyncadd [#allocation3], %s13
      %s15 = sshll.u32 [#allocation2], 4
      %s16 = int_to_ptr.vmem [resolvable:$true] %s15
      %21 = dma.hbm_to_vmem [thread:$0]  %s1, 9472, %s16, [#allocation3], 64, 64, 4
    $region9: #{textcnn_forward.1} parent=1 // pred_fallthru
      _
    // Predicated region
    $region10: #{textcnn_forward.1} parent=1 // pred_check
      _
    $region11: #{textcnn_forward.1} parent=1 // pred_check_branch
      %23 = sbr.rel (0) target = $region13
    $region12: #{textcnn_forward.1} parent=1 // pred_region
      %24 = dma.done [#allocation3], 9472
    $region13: #{textcnn_forward.1} parent=1 // pred_fallthru
      _
    %v26 = vld [vmem:[%s0] sm:$0xff]
    %v27 = vlaneseq
    %v28 = vand.u32 %v27, 127
    %29 = vset.pattern.permute.xlu0 0
    %30 = vperm.xlu0 %29, %v26
    %v31 = vpop.permute.xlu0 %30
    %vm32 = vcmp.eq.s32.totalorder %v31, %v28
    %v33 = vsel %vm32, 1, 0
    %v34 = vcvt.s32.f32 %v33
    %v35 = vpack.c.bf16 %v34, %v34
    %v36 = vld [vmem:[#allocation2] sm:$0xf]
    %v37 = vld [vmem:[#allocation2 + $0x4] sm:$0xf]
    %v38 = vld [vmem:[#allocation2 + $0x8] sm:$0xf]
    %v39 = vld [vmem:[#allocation2 + $0xc] sm:$0xf]
    %v40 = vld [vmem:[#allocation2 + $0x10] sm:$0xf]
    %v41 = vld [vmem:[#allocation2 + $0x14] sm:$0xf]
    %v42 = vld [vmem:[#allocation2 + $0x18] sm:$0xf]
    %v43 = vld [vmem:[#allocation2 + $0x1c] sm:$0xf]
    %44 = vset.pattern.permute.xlu0 1
    %45 = vperm.xlu0 %44, %v26
    %v46 = vpop.permute.xlu0 %45
    %vm47 = vcmp.eq.s32.totalorder %v46, %v28
    %v48 = vsel %vm47, 1, 0
    %v49 = vcvt.s32.f32 %v48
    %v50 = vpack.c.bf16 %v49, %v49
    %v51 = vld [vmem:[#allocation2 + $0x20] sm:$0xf]
    %v52 = vld [vmem:[#allocation2 + $0x24] sm:$0xf]
    %v53 = vld [vmem:[#allocation2 + $0x28] sm:$0xf]
    %v54 = vld [vmem:[#allocation2 + $0x2c] sm:$0xf]
    %v55 = vld [vmem:[#allocation2 + $0x30] sm:$0xf]
    %v56 = vld [vmem:[#allocation2 + $0x34] sm:$0xf]
    %v57 = vld [vmem:[#allocation2 + $0x38] sm:$0xf]
    %v58 = vld [vmem:[#allocation2 + $0x3c] sm:$0xf]
    %v67 = vunpack.c.l.b16 %v51
    %v68 = vunpack.c.l.b16 %v52
    %v69 = vunpack.c.l.b16 %v53
    %v70 = vunpack.c.l.b16 %v54
    %v71 = vunpack.c.l.b16 %v55
    %v72 = vunpack.c.l.b16 %v56
    %v73 = vunpack.c.l.b16 %v57
    %v74 = vunpack.c.l.b16 %v58
    %v75 = vpack.c.b16 %v68, %v67
    %v76 = vpack.c.b16 %v70, %v69
    %v77 = vpack.c.b16 %v72, %v71
    %v78 = vpack.c.b16 %v74, %v73
    %vm83 = vcmask 523264
    %v85 = vsel %vm83, %v50, 0
    %87 = vmatprep.subr.bf16.mxu0 0
    %88 = vmatpush1.bf16.msra.mxu0 0
    %89 = vmatprep.subr.bf16.mxu0 0
    %90 = vmatpush1.bf16.msra.mxu0 0
    %91 = vmatprep.subr.bf16.mxu0 0
    %92 = vmatpush1.bf16.msra.mxu0 0
    %93 = vmatprep.subr.bf16.mxu0 0
    %94 = vmatpush1.bf16.msra.mxu0 0
    %95 = vmatprep.subr.bf16.mxu0 0
    %96 = vmatpush1.bf16.msra.mxu0 %v78
    %97 = vmatprep.subr.bf16.mxu0 0
    %98 = vmatpush1.bf16.msra.mxu0 %v77
    %99 = vmatprep.subr.bf16.mxu0 0
    %100 = vmatpush1.bf16.msra.mxu0 %v76
    %101 = vmatprep.subr.bf16.mxu0 0
    %102 = vmatpush1.bf16.msra.mxu0 %v75
    %103 = vmatprep.subr.bf16.mxu0 0
    %104 = vmatpush2.bf16.msra.mxu0 0
    %105 = vmatprep.subr.bf16.mxu0 0
    %106 = vmatpush2.bf16.msra.mxu0 0
    %107 = vmatprep.subr.bf16.mxu0 0
    %108 = vmatpush2.bf16.msra.mxu0 0
    %109 = vmatprep.subr.bf16.mxu0 0
    %110 = vmatpush2.bf16.msra.mxu0 0
    %111 = vmatprep.subr.bf16.mxu0 0
    %112 = vmatpush2.bf16.msra.mxu0 0
    %113 = vmatprep.subr.bf16.mxu0 0
    %114 = vmatpush2.bf16.msra.mxu0 0
    %115 = vmatprep.subr.bf16.mxu0 0
    %116 = vmatpush2.bf16.msra.mxu0 0
    %117 = vmatprep.subr.bf16.mxu0 0
    %118 = vmatpush2.bf16.msra.mxu0 0
    %119 = vmatprep.mubr.bf16.mxu0 0
    %120 = vmatmul.mubr.bf16.gmra.mxu0 %v85
    %v121 = vpop.f32.mrf.mxu0
    %v122 = vadd.f32 0.0, %v121
    %v123 = vpop.f32.mrf.mxu0
    %v124 = vpop.f32.mrf.mxu0
    %v125 = vpop.f32.mrf.mxu0
    %126 = vdwg.mxu0
    %v135 = vunpack.c.l.b16 %v36
    %v136 = vunpack.c.l.b16 %v37
    %v137 = vunpack.c.l.b16 %v38
    %v138 = vunpack.c.l.b16 %v39
    %v139 = vunpack.c.l.b16 %v40
    %v140 = vunpack.c.l.b16 %v41
    %v141 = vunpack.c.l.b16 %v42
    %v142 = vunpack.c.l.b16 %v43
    %v143 = vpack.c.b16 %v136, %v135
    %v144 = vpack.c.b16 %v138, %v137
    %v145 = vpack.c.b16 %v140, %v139
    %v146 = vpack.c.b16 %v142, %v141
    %v152 = vsel %vm83, %v35, 0
    %154 = vmatprep.subr.bf16.mxu0 0
    %155 = vmatpush1.bf16.msra.mxu0 0
    %156 = vmatprep.subr.bf16.mxu0 0
    %157 = vmatpush1.bf16.msra.mxu0 0
    %158 = vmatprep.subr.bf16.mxu0 0
    %159 = vmatpush1.bf16.msra.mxu0 0
    %160 = vmatprep.subr.bf16.mxu0 0
    %161 = vmatpush1.bf16.msra.mxu0 0
    %162 = vmatprep.subr.bf16.mxu0 0
    %163 = vmatpush1.bf16.msra.mxu0 %v146
    %164 = vmatprep.subr.bf16.mxu0 0
    %165 = vmatpush1.bf16.msra.mxu0 %v145
    %166 = vmatprep.subr.bf16.mxu0 0
    %167 = vmatpush1.bf16.msra.mxu0 %v144
    %168 = vmatprep.subr.bf16.mxu0 0
    %169 = vmatpush1.bf16.msra.mxu0 %v143
    %170 = vmatprep.subr.bf16.mxu0 0
    %171 = vmatpush2.bf16.msra.mxu0 0
    %172 = vmatprep.subr.bf16.mxu0 0
    %173 = vmatpush2.bf16.msra.mxu0 0
    %174 = vmatprep.subr.bf16.mxu0 0
    %175 = vmatpush2.bf16.msra.mxu0 0
    %176 = vmatprep.subr.bf16.mxu0 0
    %177 = vmatpush2.bf16.msra.mxu0 0
    %178 = vmatprep.subr.bf16.mxu0 0
    %179 = vmatpush2.bf16.msra.mxu0 0
    %180 = vmatprep.subr.bf16.mxu0 0
    %181 = vmatpush2.bf16.msra.mxu0 0
    %182 = vmatprep.subr.bf16.mxu0 0
    %183 = vmatpush2.bf16.msra.mxu0 0
    %184 = vmatprep.subr.bf16.mxu0 0
    %185 = vmatpush2.bf16.msra.mxu0 0
    %186 = vmatprep.mubr.bf16.mxu0 0
    %187 = vmatmul.mubr.bf16.gmra.mxu0 %v152
    %v188 = vpop.f32.mrf.mxu0
    %v189 = vadd.f32 %v122, %v188
    %v190 = vpop.f32.mrf.mxu0
    %v191 = vpop.f32.mrf.mxu0
    %v192 = vpop.f32.mrf.mxu0
    %193 = vdwg.mxu0
    %194 = vset.pattern.permute.xlu0 2
    %195 = vperm.xlu0 %194, %v26
    %v196 = vpop.permute.xlu0 %195
    %vm197 = vcmp.eq.s32.totalorder %v196, %v28
    %v198 = vsel %vm197, 1, 0
    %v199 = vcvt.s32.f32 %v198
    %v200 = vpack.c.bf16 %v199, %v199
    %v201 = vld [vmem:[#allocation2 + $0x40] sm:$0xf]
    %v202 = vld [vmem:[#allocation2 + $0x44] sm:$0xf]
    %v203 = vld [vmem:[#allocation2 + $0x48] sm:$0xf]
    %v204 = vld [vmem:[#allocation2 + $0x4c] sm:$0xf]
    %v205 = vld [vmem:[#allocation2 + $0x50] sm:$0xf]
    %v206 = vld [vmem:[#allocation2 + $0x54] sm:$0xf]
    %v207 = vld [vmem:[#allocation2 + $0x58] sm:$0xf]
    %v208 = vld [vmem:[#allocation2 + $0x5c] sm:$0xf]
    %v217 = vunpack.c.l.b16 %v201
    %v218 = vunpack.c.l.b16 %v202
    %v219 = vunpack.c.l.b16 %v203
    %v220 = vunpack.c.l.b16 %v204
    %v221 = vunpack.c.l.b16 %v205
    %v222 = vunpack.c.l.b16 %v206
    %v223 = vunpack.c.l.b16 %v207
    %v224 = vunpack.c.l.b16 %v208
    %v225 = vpack.c.b16 %v218, %v217
    %v226 = vpack.c.b16 %v220, %v219
    %v227 = vpack.c.b16 %v222, %v221
    %v228 = vpack.c.b16 %v224, %v223
    %v234 = vsel %vm83, %v200, 0
    %236 = vmatprep.subr.bf16.mxu0 0
    %237 = vmatpush1.bf16.msra.mxu0 0
    %238 = vmatprep.subr.bf16.mxu0 0
    %239 = vmatpush1.bf16.msra.mxu0 0
    %240 = vmatprep.subr.bf16.mxu0 0
    %241 = vmatpush1.bf16.msra.mxu0 0
    %242 = vmatprep.subr.bf16.mxu0 0
    %243 = vmatpush1.bf16.msra.mxu0 0
    %244 = vmatprep.subr.bf16.mxu0 0
    %245 = vmatpush1.bf16.msra.mxu0 %v228
    %246 = vmatprep.subr.bf16.mxu0 0
    %247 = vmatpush1.bf16.msra.mxu0 %v227
    %248 = vmatprep.subr.bf16.mxu0 0
    %249 = vmatpush1.bf16.msra.mxu0 %v226
    %250 = vmatprep.subr.bf16.mxu0 0
    %251 = vmatpush1.bf16.msra.mxu0 %v225
    %252 = vmatprep.subr.bf16.mxu0 0
    %253 = vmatpush2.bf16.msra.mxu0 0
    %254 = vmatprep.subr.bf16.mxu0 0
    %255 = vmatpush2.bf16.msra.mxu0 0
    %256 = vmatprep.subr.bf16.mxu0 0
    %257 = vmatpush2.bf16.msra.mxu0 0
    %258 = vmatprep.subr.bf16.mxu0 0
    %259 = vmatpush2.bf16.msra.mxu0 0
    %260 = vmatprep.subr.bf16.mxu0 0
    %261 = vmatpush2.bf16.msra.mxu0 0
    %262 = vmatprep.subr.bf16.mxu0 0
    %263 = vmatpush2.bf16.msra.mxu0 0
    %264 = vmatprep.subr.bf16.mxu0 0
    %265 = vmatpush2.bf16.msra.mxu0 0
    %266 = vmatprep.subr.bf16.mxu0 0
    %267 = vmatpush2.bf16.msra.mxu0 0
    %268 = vmatprep.mubr.bf16.mxu0 0
    %269 = vmatmul.mubr.bf16.gmra.mxu0 %v234
    %v270 = vpop.f32.mrf.mxu0
    %v271 = vadd.f32 0.0, %v270
    %v272 = vpop.f32.mrf.mxu0
    %v273 = vpop.f32.mrf.mxu0
    %v274 = vpop.f32.mrf.mxu0
    %275 = vdwg.mxu0
    %v276 = vadd.f32 %v189, %v271
    %277 = vset.pattern.permute.xlu0 3
    %278 = vperm.xlu0 %277, %v26
    %v279 = vpop.permute.xlu0 %278
    %vm280 = vcmp.eq.s32.totalorder %v279, %v28
    %v281 = vsel %vm280, 1, 0
    %v282 = vcvt.s32.f32 %v281
    %v283 = vpack.c.bf16 %v282, %v282
    %v284 = vld [vmem:[#allocation2 + $0x60] sm:$0xf]
    %v285 = vld [vmem:[#allocation2 + $0x64] sm:$0xf]
    %v286 = vld [vmem:[#allocation2 + $0x68] sm:$0xf]
    %v287 = vld [vmem:[#allocation2 + $0x6c] sm:$0xf]
    %v288 = vld [vmem:[#allocation2 + $0x70] sm:$0xf]
    %v289 = vld [vmem:[#allocation2 + $0x74] sm:$0xf]
    %v290 = vld [vmem:[#allocation2 + $0x78] sm:$0xf]
    %v291 = vld [vmem:[#allocation2 + $0x7c] sm:$0xf]
    %v300 = vunpack.c.l.b16 %v284
    %v301 = vunpack.c.l.b16 %v285
    %v302 = vunpack.c.l.b16 %v286
    %v303 = vunpack.c.l.b16 %v287
    %v304 = vunpack.c.l.b16 %v288
    %v305 = vunpack.c.l.b16 %v289
    %v306 = vunpack.c.l.b16 %v290
    %v307 = vunpack.c.l.b16 %v291
    %v308 = vpack.c.b16 %v301, %v300
    %v309 = vpack.c.b16 %v303, %v302
    %v310 = vpack.c.b16 %v305, %v304
    %v311 = vpack.c.b16 %v307, %v306
    %v317 = vsel %vm83, %v283, 0
    %319 = vmatprep.subr.bf16.mxu0 0
    %320 = vmatpush1.bf16.msra.mxu0 0
    %321 = vmatprep.subr.bf16.mxu0 0
    %322 = vmatpush1.bf16.msra.mxu0 0
    %323 = vmatprep.subr.bf16.mxu0 0
    %324 = vmatpush1.bf16.msra.mxu0 0
    %325 = vmatprep.subr.bf16.mxu0 0
    %326 = vmatpush1.bf16.msra.mxu0 0
    %327 = vmatprep.subr.bf16.mxu0 0
    %328 = vmatpush1.bf16.msra.mxu0 %v311
    %329 = vmatprep.subr.bf16.mxu0 0
    %330 = vmatpush1.bf16.msra.mxu0 %v310
    %331 = vmatprep.subr.bf16.mxu0 0
    %332 = vmatpush1.bf16.msra.mxu0 %v309
    %333 = vmatprep.subr.bf16.mxu0 0
    %334 = vmatpush1.bf16.msra.mxu0 %v308
    %335 = vmatprep.subr.bf16.mxu0 0
    %336 = vmatpush2.bf16.msra.mxu0 0
    %337 = vmatprep.subr.bf16.mxu0 0
    %338 = vmatpush2.bf16.msra.mxu0 0
    %339 = vmatprep.subr.bf16.mxu0 0
    %340 = vmatpush2.bf16.msra.mxu0 0
    %341 = vmatprep.subr.bf16.mxu0 0
    %342 = vmatpush2.bf16.msra.mxu0 0
    %343 = vmatprep.subr.bf16.mxu0 0
    %344 = vmatpush2.bf16.msra.mxu0 0
    %345 = vmatprep.subr.bf16.mxu0 0
    %346 = vmatpush2.bf16.msra.mxu0 0
    %347 = vmatprep.subr.bf16.mxu0 0
    %348 = vmatpush2.bf16.msra.mxu0 0
    %349 = vmatprep.subr.bf16.mxu0 0
    %350 = vmatpush2.bf16.msra.mxu0 0
    %351 = vmatprep.mubr.bf16.mxu0 0
    %352 = vmatmul.mubr.bf16.gmra.mxu0 %v317
    %v353 = vpop.f32.mrf.mxu0
    %v354 = vadd.f32 0.0, %v353
    %v355 = vpop.f32.mrf.mxu0
    %v356 = vpop.f32.mrf.mxu0
    %v357 = vpop.f32.mrf.mxu0
    %358 = vdwg.mxu0
    %v359 = vadd.f32 %v276, %v354
    %360 = vset.pattern.permute.xlu0 4
    %361 = vperm.xlu0 %360, %v26
    %v362 = vpop.permute.xlu0 %361
    %vm363 = vcmp.eq.s32.totalorder %v362, %v28
    %v364 = vsel %vm363, 1, 0
    %v365 = vcvt.s32.f32 %v364
    %v366 = vpack.c.bf16 %v365, %v365
    %v367 = vld [vmem:[#allocation2 + $0x80] sm:$0xf]
    %v368 = vld [vmem:[#allocation2 + $0x84] sm:$0xf]
    %v369 = vld [vmem:[#allocation2 + $0x88] sm:$0xf]
    %v370 = vld [vmem:[#allocation2 + $0x8c] sm:$0xf]
    %v371 = vld [vmem:[#allocation2 + $0x90] sm:$0xf]
    %v372 = vld [vmem:[#allocation2 + $0x94] sm:$0xf]
    %v373 = vld [vmem:[#allocation2 + $0x98] sm:$0xf]
    %v374 = vld [vmem:[#allocation2 + $0x9c] sm:$0xf]
    %v383 = vunpack.c.l.b16 %v367
    %v384 = vunpack.c.l.b16 %v368
    %v385 = vunpack.c.l.b16 %v369
    %v386 = vunpack.c.l.b16 %v370
    %v387 = vunpack.c.l.b16 %v371
    %v388 = vunpack.c.l.b16 %v372
    %v389 = vunpack.c.l.b16 %v373
    %v390 = vunpack.c.l.b16 %v374
    %v391 = vpack.c.b16 %v384, %v383
    %v392 = vpack.c.b16 %v386, %v385
    %v393 = vpack.c.b16 %v388, %v387
    %v394 = vpack.c.b16 %v390, %v389
    %v400 = vsel %vm83, %v366, 0
    %402 = vmatprep.subr.bf16.mxu0 0
    %403 = vmatpush1.bf16.msra.mxu0 0
    %404 = vmatprep.subr.bf16.mxu0 0
    %405 = vmatpush1.bf16.msra.mxu0 0
    %406 = vmatprep.subr.bf16.mxu0 0
    %407 = vmatpush1.bf16.msra.mxu0 0
    %408 = vmatprep.subr.bf16.mxu0 0
    %409 = vmatpush1.bf16.msra.mxu0 0
    %410 = vmatprep.subr.bf16.mxu0 0
    %411 = vmatpush1.bf16.msra.mxu0 %v394
    %412 = vmatprep.subr.bf16.mxu0 0
    %413 = vmatpush1.bf16.msra.mxu0 %v393
    %414 = vmatprep.subr.bf16.mxu0 0
    %415 = vmatpush1.bf16.msra.mxu0 %v392
    %416 = vmatprep.subr.bf16.mxu0 0
    %417 = vmatpush1.bf16.msra.mxu0 %v391
    %418 = vmatprep.subr.bf16.mxu0 0
    %419 = vmatpush2.bf16.msra.mxu0 0
    %420 = vmatprep.subr.bf16.mxu0 0
    %421 = vmatpush2.bf16.msra.mxu0 0
    %422 = vmatprep.subr.bf16.mxu0 0
    %423 = vmatpush2.bf16.msra.mxu0 0
    %424 = vmatprep.subr.bf16.mxu0 0
    %425 = vmatpush2.bf16.msra.mxu0 0
    %426 = vmatprep.subr.bf16.mxu0 0
    %427 = vmatpush2.bf16.msra.mxu0 0
    %428 = vmatprep.subr.bf16.mxu0 0
    %429 = vmatpush2.bf16.msra.mxu0 0
    %430 = vmatprep.subr.bf16.mxu0 0
    %431 = vmatpush2.bf16.msra.mxu0 0
    %432 = vmatprep.subr.bf16.mxu0 0
    %433 = vmatpush2.bf16.msra.mxu0 0
    %434 = vmatprep.mubr.bf16.mxu0 0
    %435 = vmatmul.mubr.bf16.gmra.mxu0 %v400
    %v436 = vpop.f32.mrf.mxu0
    %v437 = vadd.f32 0.0, %v436
    %v438 = vpop.f32.mrf.mxu0
    %v439 = vpop.f32.mrf.mxu0
    %v440 = vpop.f32.mrf.mxu0
    %441 = vdwg.mxu0
    %v442 = vadd.f32 %v359, %v437
    %443 = vset.pattern.permute.xlu0 5
    %444 = vperm.xlu0 %443, %v26
    %v445 = vpop.permute.xlu0 %444
    %vm446 = vcmp.eq.s32.totalorder %v445, %v28
    %v447 = vsel %vm446, 1, 0
    %v448 = vcvt.s32.f32 %v447
    %v449 = vpack.c.bf16 %v448, %v448
    %v450 = vld [vmem:[#allocation2 + $0xa0] sm:$0xf]
    %v451 = vld [vmem:[#allocation2 + $0xa4] sm:$0xf]
    %v452 = vld [vmem:[#allocation2 + $0xa8] sm:$0xf]
    %v453 = vld [vmem:[#allocation2 + $0xac] sm:$0xf]
    %v454 = vld [vmem:[#allocation2 + $0xb0] sm:$0xf]
    %v455 = vld [vmem:[#allocation2 + $0xb4] sm:$0xf]
    %v456 = vld [vmem:[#allocation2 + $0xb8] sm:$0xf]
    %v457 = vld [vmem:[#allocation2 + $0xbc] sm:$0xf]
    %v466 = vunpack.c.l.b16 %v450
    %v467 = vunpack.c.l.b16 %v451
    %v468 = vunpack.c.l.b16 %v452
    %v469 = vunpack.c.l.b16 %v453
    %v470 = vunpack.c.l.b16 %v454
    %v471 = vunpack.c.l.b16 %v455
    %v472 = vunpack.c.l.b16 %v456
    %v473 = vunpack.c.l.b16 %v457
    %v474 = vpack.c.b16 %v467, %v466
    %v475 = vpack.c.b16 %v469, %v468
    %v476 = vpack.c.b16 %v471, %v470
    %v477 = vpack.c.b16 %v473, %v472
    %v483 = vsel %vm83, %v449, 0
    %485 = vmatprep.subr.bf16.mxu0 0
    %486 = vmatpush1.bf16.msra.mxu0 0
    %487 = vmatprep.subr.bf16.mxu0 0
    %488 = vmatpush1.bf16.msra.mxu0 0
    %489 = vmatprep.subr.bf16.mxu0 0
    %490 = vmatpush1.bf16.msra.mxu0 0
    %491 = vmatprep.subr.bf16.mxu0 0
    %492 = vmatpush1.bf16.msra.mxu0 0
    %493 = vmatprep.subr.bf16.mxu0 0
    %494 = vmatpush1.bf16.msra.mxu0 %v477
    %495 = vmatprep.subr.bf16.mxu0 0
    %496 = vmatpush1.bf16.msra.mxu0 %v476
    %497 = vmatprep.subr.bf16.mxu0 0
    %498 = vmatpush1.bf16.msra.mxu0 %v475
    %499 = vmatprep.subr.bf16.mxu0 0
    %500 = vmatpush1.bf16.msra.mxu0 %v474
    %501 = vmatprep.subr.bf16.mxu0 0
    %502 = vmatpush2.bf16.msra.mxu0 0
    %503 = vmatprep.subr.bf16.mxu0 0
    %504 = vmatpush2.bf16.msra.mxu0 0
    %505 = vmatprep.subr.bf16.mxu0 0
    %506 = vmatpush2.bf16.msra.mxu0 0
    %507 = vmatprep.subr.bf16.mxu0 0
    %508 = vmatpush2.bf16.msra.mxu0 0
    %509 = vmatprep.subr.bf16.mxu0 0
    %510 = vmatpush2.bf16.msra.mxu0 0
    %511 = vmatprep.subr.bf16.mxu0 0
    %512 = vmatpush2.bf16.msra.mxu0 0
    %513 = vmatprep.subr.bf16.mxu0 0
    %514 = vmatpush2.bf16.msra.mxu0 0
    %515 = vmatprep.subr.bf16.mxu0 0
    %516 = vmatpush2.bf16.msra.mxu0 0
    %517 = vmatprep.mubr.bf16.mxu0 0
    %518 = vmatmul.mubr.bf16.gmra.mxu0 %v483
    %v519 = vpop.f32.mrf.mxu0
    %v520 = vadd.f32 0.0, %v519
    %v521 = vpop.f32.mrf.mxu0
    %v522 = vpop.f32.mrf.mxu0
    %v523 = vpop.f32.mrf.mxu0
    %524 = vdwg.mxu0
    %v525 = vadd.f32 %v442, %v520
    %526 = vset.pattern.permute.xlu0 6
    %527 = vperm.xlu0 %526, %v26
    %v528 = vpop.permute.xlu0 %527
    %vm529 = vcmp.eq.s32.totalorder %v528, %v28
    %v530 = vsel %vm529, 1, 0
    %v531 = vcvt.s32.f32 %v530
    %v532 = vpack.c.bf16 %v531, %v531
    %v533 = vld [vmem:[#allocation2 + $0xc0] sm:$0xf]
    %v534 = vld [vmem:[#allocation2 + $0xc4] sm:$0xf]
    %v535 = vld [vmem:[#allocation2 + $0xc8] sm:$0xf]
    %v536 = vld [vmem:[#allocation2 + $0xcc] sm:$0xf]
    %v537 = vld [vmem:[#allocation2 + $0xd0] sm:$0xf]
    %v538 = vld [vmem:[#allocation2 + $0xd4] sm:$0xf]
    %v539 = vld [vmem:[#allocation2 + $0xd8] sm:$0xf]
    %v540 = vld [vmem:[#allocation2 + $0xdc] sm:$0xf]
    %v549 = vunpack.c.l.b16 %v533
    %v550 = vunpack.c.l.b16 %v534
    %v551 = vunpack.c.l.b16 %v535
    %v552 = vunpack.c.l.b16 %v536
    %v553 = vunpack.c.l.b16 %v537
    %v554 = vunpack.c.l.b16 %v538
    %v555 = vunpack.c.l.b16 %v539
    %v556 = vunpack.c.l.b16 %v540
    %v557 = vpack.c.b16 %v550, %v549
    %v558 = vpack.c.b16 %v552, %v551
    %v559 = vpack.c.b16 %v554, %v553
    %v560 = vpack.c.b16 %v556, %v555
    %v566 = vsel %vm83, %v532, 0
    %568 = vmatprep.subr.bf16.mxu0 0
    %569 = vmatpush1.bf16.msra.mxu0 0
    %570 = vmatprep.subr.bf16.mxu0 0
    %571 = vmatpush1.bf16.msra.mxu0 0
    %572 = vmatprep.subr.bf16.mxu0 0
    %573 = vmatpush1.bf16.msra.mxu0 0
    %574 = vmatprep.subr.bf16.mxu0 0
    %575 = vmatpush1.bf16.msra.mxu0 0
    %576 = vmatprep.subr.bf16.mxu0 0
    %577 = vmatpush1.bf16.msra.mxu0 %v560
    %578 = vmatprep.subr.bf16.mxu0 0
    %579 = vmatpush1.bf16.msra.mxu0 %v559
    %580 = vmatprep.subr.bf16.mxu0 0
    %581 = vmatpush1.bf16.msra.mxu0 %v558
    %582 = vmatprep.subr.bf16.mxu0 0
    %583 = vmatpush1.bf16.msra.mxu0 %v557
    %584 = vmatprep.subr.bf16.mxu0 0
    %585 = vmatpush2.bf16.msra.mxu0 0
    %586 = vmatprep.subr.bf16.mxu0 0
    %587 = vmatpush2.bf16.msra.mxu0 0
    %588 = vmatprep.subr.bf16.mxu0 0
    %589 = vmatpush2.bf16.msra.mxu0 0
    %590 = vmatprep.subr.bf16.mxu0 0
    %591 = vmatpush2.bf16.msra.mxu0 0
    %592 = vmatprep.subr.bf16.mxu0 0
    %593 = vmatpush2.bf16.msra.mxu0 0
    %594 = vmatprep.subr.bf16.mxu0 0
    %595 = vmatpush2.bf16.msra.mxu0 0
    %596 = vmatprep.subr.bf16.mxu0 0
    %597 = vmatpush2.bf16.msra.mxu0 0
    %598 = vmatprep.subr.bf16.mxu0 0
    %599 = vmatpush2.bf16.msra.mxu0 0
    %600 = vmatprep.mubr.bf16.mxu0 0
    %601 = vmatmul.mubr.bf16.gmra.mxu0 %v566
    %v602 = vpop.f32.mrf.mxu0
    %v603 = vadd.f32 0.0, %v602
    %v604 = vpop.f32.mrf.mxu0
    %v605 = vpop.f32.mrf.mxu0
    %v606 = vpop.f32.mrf.mxu0
    %607 = vdwg.mxu0
    %v608 = vadd.f32 %v525, %v603
    %609 = vset.pattern.permute.xlu0 7
    %610 = vperm.xlu0 %609, %v26
    %v611 = vpop.permute.xlu0 %610
    %vm612 = vcmp.eq.s32.totalorder %v611, %v28
    %v613 = vsel %vm612, 1, 0
    %v614 = vcvt.s32.f32 %v613
    %v615 = vpack.c.bf16 %v614, %v614
    %v616 = vld [vmem:[#allocation2 + $0xe0] sm:$0xf]
    %v617 = vld [vmem:[#allocation2 + $0xe4] sm:$0xf]
    %v618 = vld [vmem:[#allocation2 + $0xe8] sm:$0xf]
    %v619 = vld [vmem:[#allocation2 + $0xec] sm:$0xf]
    %v620 = vld [vmem:[#allocation2 + $0xf0] sm:$0xf]
    %v621 = vld [vmem:[#allocation2 + $0xf4] sm:$0xf]
    %v622 = vld [vmem:[#allocation2 + $0xf8] sm:$0xf]
    %v623 = vld [vmem:[#allocation2 + $0xfc] sm:$0xf]
    %v632 = vunpack.c.l.b16 %v616
    %v633 = vunpack.c.l.b16 %v617
    %v634 = vunpack.c.l.b16 %v618
    %v635 = vunpack.c.l.b16 %v619
    %v636 = vunpack.c.l.b16 %v620
    %v637 = vunpack.c.l.b16 %v621
    %v638 = vunpack.c.l.b16 %v622
    %v639 = vunpack.c.l.b16 %v623
    %v640 = vpack.c.b16 %v633, %v632
    %v641 = vpack.c.b16 %v635, %v634
    %v642 = vpack.c.b16 %v637, %v636
    %v643 = vpack.c.b16 %v639, %v638
    %v649 = vsel %vm83, %v615, 0
    %651 = vmatprep.subr.bf16.mxu0 0
    %652 = vmatpush1.bf16.msra.mxu0 0
    %653 = vmatprep.subr.bf16.mxu0 0
    %654 = vmatpush1.bf16.msra.mxu0 0
    %655 = vmatprep.subr.bf16.mxu0 0
    %656 = vmatpush1.bf16.msra.mxu0 0
    %657 = vmatprep.subr.bf16.mxu0 0
    %658 = vmatpush1.bf16.msra.mxu0 0
    %659 = vmatprep.subr.bf16.mxu0 0
    %660 = vmatpush1.bf16.msra.mxu0 %v643
    %661 = vmatprep.subr.bf16.mxu0 0
    %662 = vmatpush1.bf16.msra.mxu0 %v642
    %663 = vmatprep.subr.bf16.mxu0 0
    %664 = vmatpush1.bf16.msra.mxu0 %v641
    %665 = vmatprep.subr.bf16.mxu0 0
    %666 = vmatpush1.bf16.msra.mxu0 %v640
    %667 = vmatprep.subr.bf16.mxu0 0
    %668 = vmatpush2.bf16.msra.mxu0 0
    %669 = vmatprep.subr.bf16.mxu0 0
    %670 = vmatpush2.bf16.msra.mxu0 0
    %671 = vmatprep.subr.bf16.mxu0 0
    %672 = vmatpush2.bf16.msra.mxu0 0
    %673 = vmatprep.subr.bf16.mxu0 0
    %674 = vmatpush2.bf16.msra.mxu0 0
    %675 = vmatprep.subr.bf16.mxu0 0
    %676 = vmatpush2.bf16.msra.mxu0 0
    %677 = vmatprep.subr.bf16.mxu0 0
    %678 = vmatpush2.bf16.msra.mxu0 0
    %679 = vmatprep.subr.bf16.mxu0 0
    %680 = vmatpush2.bf16.msra.mxu0 0
    %681 = vmatprep.subr.bf16.mxu0 0
    %682 = vmatpush2.bf16.msra.mxu0 0
    %683 = vmatprep.mubr.bf16.mxu0 0
    %684 = vmatmul.mubr.bf16.gmra.mxu0 %v649
    %v685 = vpop.f32.mrf.mxu0
    %v686 = vadd.f32 0.0, %v685
    %v687 = vpop.f32.mrf.mxu0
    %v688 = vpop.f32.mrf.mxu0
    %v689 = vpop.f32.mrf.mxu0
    %690 = vdwg.mxu0
    %v691 = vadd.f32 %v608, %v686
    %692 = vset.pattern.permute.xlu0 8
    %693 = vperm.xlu0 %692, %v26
    %v694 = vpop.permute.xlu0 %693
    %vm695 = vcmp.eq.s32.totalorder %v694, %v28
    %v696 = vsel %vm695, 1, 0
    %v697 = vcvt.s32.f32 %v696
    %v698 = vpack.c.bf16 %v697, %v697
    %v699 = vld [vmem:[#allocation2 + $0x100] sm:$0xf]
    %v700 = vld [vmem:[#allocation2 + $0x104] sm:$0xf]
    %v701 = vld [vmem:[#allocation2 + $0x108] sm:$0xf]
    %v702 = vld [vmem:[#allocation2 + $0x10c] sm:$0xf]
    %v703 = vld [vmem:[#allocation2 + $0x110] sm:$0xf]
    %v704 = vld [vmem:[#allocation2 + $0x114] sm:$0xf]
    %v705 = vld [vmem:[#allocation2 + $0x118] sm:$0xf]
    %v706 = vld [vmem:[#allocation2 + $0x11c] sm:$0xf]
    %v715 = vunpack.c.l.b16 %v699
    %v716 = vunpack.c.l.b16 %v700
    %v717 = vunpack.c.l.b16 %v701
    %v718 = vunpack.c.l.b16 %v702
    %v719 = vunpack.c.l.b16 %v703
    %v720 = vunpack.c.l.b16 %v704
    %v721 = vunpack.c.l.b16 %v705
    %v722 = vunpack.c.l.b16 %v706
    %v723 = vpack.c.b16 %v716, %v715
    %v724 = vpack.c.b16 %v718, %v717
    %v725 = vpack.c.b16 %v720, %v719
    %v726 = vpack.c.b16 %v722, %v721
    %v732 = vsel %vm83, %v698, 0
    %734 = vmatprep.subr.bf16.mxu0 0
    %735 = vmatpush1.bf16.msra.mxu0 0
    %736 = vmatprep.subr.bf16.mxu0 0
    %737 = vmatpush1.bf16.msra.mxu0 0
    %738 = vmatprep.subr.bf16.mxu0 0
    %739 = vmatpush1.bf16.msra.mxu0 0
    %740 = vmatprep.subr.bf16.mxu0 0
    %741 = vmatpush1.bf16.msra.mxu0 0
    %742 = vmatprep.subr.bf16.mxu0 0
    %743 = vmatpush1.bf16.msra.mxu0 %v726
    %744 = vmatprep.subr.bf16.mxu0 0
    %745 = vmatpush1.bf16.msra.mxu0 %v725
    %746 = vmatprep.subr.bf16.mxu0 0
    %747 = vmatpush1.bf16.msra.mxu0 %v724
    %748 = vmatprep.subr.bf16.mxu0 0
    %749 = vmatpush1.bf16.msra.mxu0 %v723
    %750 = vmatprep.subr.bf16.mxu0 0
    %751 = vmatpush2.bf16.msra.mxu0 0
    %752 = vmatprep.subr.bf16.mxu0 0
    %753 = vmatpush2.bf16.msra.mxu0 0
    %754 = vmatprep.subr.bf16.mxu0 0
    %755 = vmatpush2.bf16.msra.mxu0 0
    %756 = vmatprep.subr.bf16.mxu0 0
    %757 = vmatpush2.bf16.msra.mxu0 0
    %758 = vmatprep.subr.bf16.mxu0 0
    %759 = vmatpush2.bf16.msra.mxu0 0
    %760 = vmatprep.subr.bf16.mxu0 0
    %761 = vmatpush2.bf16.msra.mxu0 0
    %762 = vmatprep.subr.bf16.mxu0 0
    %763 = vmatpush2.bf16.msra.mxu0 0
    %764 = vmatprep.subr.bf16.mxu0 0
    %765 = vmatpush2.bf16.msra.mxu0 0
    %766 = vmatprep.mubr.bf16.mxu0 0
    %767 = vmatmul.mubr.bf16.gmra.mxu0 %v732
    %v768 = vpop.f32.mrf.mxu0
    %v769 = vadd.f32 0.0, %v768
    %v770 = vpop.f32.mrf.mxu0
    %v771 = vpop.f32.mrf.mxu0
    %v772 = vpop.f32.mrf.mxu0
    %773 = vdwg.mxu0
    %v774 = vadd.f32 %v691, %v769
    %775 = vset.pattern.permute.xlu0 9
    %776 = vperm.xlu0 %775, %v26
    %v777 = vpop.permute.xlu0 %776
    %vm778 = vcmp.eq.s32.totalorder %v777, %v28
    %v779 = vsel %vm778, 1, 0
    %v780 = vcvt.s32.f32 %v779
    %v781 = vpack.c.bf16 %v780, %v780
    %v782 = vld [vmem:[#allocation2 + $0x120] sm:$0xf]
    %v783 = vld [vmem:[#allocation2 + $0x124] sm:$0xf]
    %v784 = vld [vmem:[#allocation2 + $0x128] sm:$0xf]
    %v785 = vld [vmem:[#allocation2 + $0x12c] sm:$0xf]
    %v786 = vld [vmem:[#allocation2 + $0x130] sm:$0xf]
    %v787 = vld [vmem:[#allocation2 + $0x134] sm:$0xf]
    %v788 = vld [vmem:[#allocation2 + $0x138] sm:$0xf]
    %v789 = vld [vmem:[#allocation2 + $0x13c] sm:$0xf]
    %v798 = vunpack.c.l.b16 %v782
    %v799 = vunpack.c.l.b16 %v783
    %v800 = vunpack.c.l.b16 %v784
    %v801 = vunpack.c.l.b16 %v785
    %v802 = vunpack.c.l.b16 %v786
    %v803 = vunpack.c.l.b16 %v787
    %v804 = vunpack.c.l.b16 %v788
    %v805 = vunpack.c.l.b16 %v789
    %v806 = vpack.c.b16 %v799, %v798
    %v807 = vpack.c.b16 %v801, %v800
    %v808 = vpack.c.b16 %v803, %v802
    %v809 = vpack.c.b16 %v805, %v804
    %v815 = vsel %vm83, %v781, 0
    %817 = vmatprep.subr.bf16.mxu0 0
    %818 = vmatpush1.bf16.msra.mxu0 0
    %819 = vmatprep.subr.bf16.mxu0 0
    %820 = vmatpush1.bf16.msra.mxu0 0
    %821 = vmatprep.subr.bf16.mxu0 0
    %822 = vmatpush1.bf16.msra.mxu0 0
    %823 = vmatprep.subr.bf16.mxu0 0
    %824 = vmatpush1.bf16.msra.mxu0 0
    %825 = vmatprep.subr.bf16.mxu0 0
    %826 = vmatpush1.bf16.msra.mxu0 %v809
    %827 = vmatprep.subr.bf16.mxu0 0
    %828 = vmatpush1.bf16.msra.mxu0 %v808
    %829 = vmatprep.subr.bf16.mxu0 0
    %830 = vmatpush1.bf16.msra.mxu0 %v807
    %831 = vmatprep.subr.bf16.mxu0 0
    %832 = vmatpush1.bf16.msra.mxu0 %v806
    %833 = vmatprep.subr.bf16.mxu0 0
    %834 = vmatpush2.bf16.msra.mxu0 0
    %835 = vmatprep.subr.bf16.mxu0 0
    %836 = vmatpush2.bf16.msra.mxu0 0
    %837 = vmatprep.subr.bf16.mxu0 0
    %838 = vmatpush2.bf16.msra.mxu0 0
    %839 = vmatprep.subr.bf16.mxu0 0
    %840 = vmatpush2.bf16.msra.mxu0 0
    %841 = vmatprep.subr.bf16.mxu0 0
    %842 = vmatpush2.bf16.msra.mxu0 0
    %843 = vmatprep.subr.bf16.mxu0 0
    %844 = vmatpush2.bf16.msra.mxu0 0
    %845 = vmatprep.subr.bf16.mxu0 0
    %846 = vmatpush2.bf16.msra.mxu0 0
    %847 = vmatprep.subr.bf16.mxu0 0
    %848 = vmatpush2.bf16.msra.mxu0 0
    %849 = vmatprep.mubr.bf16.mxu0 0
    %850 = vmatmul.mubr.bf16.gmra.mxu0 %v815
    %v851 = vpop.f32.mrf.mxu0
    %v852 = vadd.f32 0.0, %v851
    %v853 = vpop.f32.mrf.mxu0
    %v854 = vpop.f32.mrf.mxu0
    %v855 = vpop.f32.mrf.mxu0
    %856 = vdwg.mxu0
    %v857 = vadd.f32 %v774, %v852
    %858 = vset.pattern.permute.xlu0 10
    %859 = vperm.xlu0 %858, %v26
    %v860 = vpop.permute.xlu0 %859
    %vm861 = vcmp.eq.s32.totalorder %v860, %v28
    %v862 = vsel %vm861, 1, 0
    %v863 = vcvt.s32.f32 %v862
    %v864 = vpack.c.bf16 %v863, %v863
    %v865 = vld [vmem:[#allocation2 + $0x140] sm:$0xf]
    %v866 = vld [vmem:[#allocation2 + $0x144] sm:$0xf]
    %v867 = vld [vmem:[#allocation2 + $0x148] sm:$0xf]
    %v868 = vld [vmem:[#allocation2 + $0x14c] sm:$0xf]
    %v869 = vld [vmem:[#allocation2 + $0x150] sm:$0xf]
    %v870 = vld [vmem:[#allocation2 + $0x154] sm:$0xf]
    %v871 = vld [vmem:[#allocation2 + $0x158] sm:$0xf]
    %v872 = vld [vmem:[#allocation2 + $0x15c] sm:$0xf]
    %v881 = vunpack.c.l.b16 %v865
    %v882 = vunpack.c.l.b16 %v866
    %v883 = vunpack.c.l.b16 %v867
    %v884 = vunpack.c.l.b16 %v868
    %v885 = vunpack.c.l.b16 %v869
    %v886 = vunpack.c.l.b16 %v870
    %v887 = vunpack.c.l.b16 %v871
    %v888 = vunpack.c.l.b16 %v872
    %v889 = vpack.c.b16 %v882, %v881
    %v890 = vpack.c.b16 %v884, %v883
    %v891 = vpack.c.b16 %v886, %v885
    %v892 = vpack.c.b16 %v888, %v887
    %v898 = vsel %vm83, %v864, 0
    %900 = vmatprep.subr.bf16.mxu0 0
    %901 = vmatpush1.bf16.msra.mxu0 0
    %902 = vmatprep.subr.bf16.mxu0 0
    %903 = vmatpush1.bf16.msra.mxu0 0
    %904 = vmatprep.subr.bf16.mxu0 0
    %905 = vmatpush1.bf16.msra.mxu0 0
    %906 = vmatprep.subr.bf16.mxu0 0
    %907 = vmatpush1.bf16.msra.mxu0 0
    %908 = vmatprep.subr.bf16.mxu0 0
    %909 = vmatpush1.bf16.msra.mxu0 %v892
    %910 = vmatprep.subr.bf16.mxu0 0
    %911 = vmatpush1.bf16.msra.mxu0 %v891
    %912 = vmatprep.subr.bf16.mxu0 0
    %913 = vmatpush1.bf16.msra.mxu0 %v890
    %914 = vmatprep.subr.bf16.mxu0 0
    %915 = vmatpush1.bf16.msra.mxu0 %v889
    %916 = vmatprep.subr.bf16.mxu0 0
    %917 = vmatpush2.bf16.msra.mxu0 0
    %918 = vmatprep.subr.bf16.mxu0 0
    %919 = vmatpush2.bf16.msra.mxu0 0
    %920 = vmatprep.subr.bf16.mxu0 0
    %921 = vmatpush2.bf16.msra.mxu0 0
    %922 = vmatprep.subr.bf16.mxu0 0
    %923 = vmatpush2.bf16.msra.mxu0 0
    %924 = vmatprep.subr.bf16.mxu0 0
    %925 = vmatpush2.bf16.msra.mxu0 0
    %926 = vmatprep.subr.bf16.mxu0 0
    %927 = vmatpush2.bf16.msra.mxu0 0
    %928 = vmatprep.subr.bf16.mxu0 0
    %929 = vmatpush2.bf16.msra.mxu0 0
    %930 = vmatprep.subr.bf16.mxu0 0
    %931 = vmatpush2.bf16.msra.mxu0 0
    %932 = vmatprep.mubr.bf16.mxu0 0
    %933 = vmatmul.mubr.bf16.gmra.mxu0 %v898
    %v934 = vpop.f32.mrf.mxu0
    %v935 = vadd.f32 0.0, %v934
    %v936 = vpop.f32.mrf.mxu0
    %v937 = vpop.f32.mrf.mxu0
    %v938 = vpop.f32.mrf.mxu0
    %939 = vdwg.mxu0
    %v940 = vadd.f32 %v857, %v935
    %941 = vset.pattern.permute.xlu0 11
    %942 = vperm.xlu0 %941, %v26
    %v943 = vpop.permute.xlu0 %942
    %vm944 = vcmp.eq.s32.totalorder %v943, %v28
    %v945 = vsel %vm944, 1, 0
    %v946 = vcvt.s32.f32 %v945
    %v947 = vpack.c.bf16 %v946, %v946
    %v948 = vld [vmem:[#allocation2 + $0x160] sm:$0xf]
    %v949 = vld [vmem:[#allocation2 + $0x164] sm:$0xf]
    %v950 = vld [vmem:[#allocation2 + $0x168] sm:$0xf]
    %v951 = vld [vmem:[#allocation2 + $0x16c] sm:$0xf]
    %v952 = vld [vmem:[#allocation2 + $0x170] sm:$0xf]
    %v953 = vld [vmem:[#allocation2 + $0x174] sm:$0xf]
    %v954 = vld [vmem:[#allocation2 + $0x178] sm:$0xf]
    %v955 = vld [vmem:[#allocation2 + $0x17c] sm:$0xf]
    %v964 = vunpack.c.l.b16 %v948
    %v965 = vunpack.c.l.b16 %v949
    %v966 = vunpack.c.l.b16 %v950
    %v967 = vunpack.c.l.b16 %v951
    %v968 = vunpack.c.l.b16 %v952
    %v969 = vunpack.c.l.b16 %v953
    %v970 = vunpack.c.l.b16 %v954
    %v971 = vunpack.c.l.b16 %v955
    %v972 = vpack.c.b16 %v965, %v964
    %v973 = vpack.c.b16 %v967, %v966
    %v974 = vpack.c.b16 %v969, %v968
    %v975 = vpack.c.b16 %v971, %v970
    %v981 = vsel %vm83, %v947, 0
    %983 = vmatprep.subr.bf16.mxu0 0
    %984 = vmatpush1.bf16.msra.mxu0 0
    %985 = vmatprep.subr.bf16.mxu0 0
    %986 = vmatpush1.bf16.msra.mxu0 0
    %987 = vmatprep.subr.bf16.mxu0 0
    %988 = vmatpush1.bf16.msra.mxu0 0
    %989 = vmatprep.subr.bf16.mxu0 0
    %990 = vmatpush1.bf16.msra.mxu0 0
    %991 = vmatprep.subr.bf16.mxu0 0
    %992 = vmatpush1.bf16.msra.mxu0 %v975
    %993 = vmatprep.subr.bf16.mxu0 0
    %994 = vmatpush1.bf16.msra.mxu0 %v974
    %995 = vmatprep.subr.bf16.mxu0 0
    %996 = vmatpush1.bf16.msra.mxu0 %v973
    %997 = vmatprep.subr.bf16.mxu0 0
    %998 = vmatpush1.bf16.msra.mxu0 %v972
    %999 = vmatprep.subr.bf16.mxu0 0
    %1000 = vmatpush2.bf16.msra.mxu0 0
    %1001 = vmatprep.subr.bf16.mxu0 0
    %1002 = vmatpush2.bf16.msra.mxu0 0
    %1003 = vmatprep.subr.bf16.mxu0 0
    %1004 = vmatpush2.bf16.msra.mxu0 0
    %1005 = vmatprep.subr.bf16.mxu0 0
    %1006 = vmatpush2.bf16.msra.mxu0 0
    %1007 = vmatprep.subr.bf16.mxu0 0
    %1008 = vmatpush2.bf16.msra.mxu0 0
    %1009 = vmatprep.subr.bf16.mxu0 0
    %1010 = vmatpush2.bf16.msra.mxu0 0
    %1011 = vmatprep.subr.bf16.mxu0 0
    %1012 = vmatpush2.bf16.msra.mxu0 0
    %1013 = vmatprep.subr.bf16.mxu0 0
    %1014 = vmatpush2.bf16.msra.mxu0 0
    %1015 = vmatprep.mubr.bf16.mxu0 0
    %1016 = vmatmul.mubr.bf16.gmra.mxu0 %v981
    %v1017 = vpop.f32.mrf.mxu0
    %v1018 = vadd.f32 0.0, %v1017
    %v1019 = vpop.f32.mrf.mxu0
    %v1020 = vpop.f32.mrf.mxu0
    %v1021 = vpop.f32.mrf.mxu0
    %1022 = vdwg.mxu0
    %v1023 = vadd.f32 %v940, %v1018
    %1024 = vset.pattern.permute.xlu0 12
    %1025 = vperm.xlu0 %1024, %v26
    %v1026 = vpop.permute.xlu0 %1025
    %vm1027 = vcmp.eq.s32.totalorder %v1026, %v28
    %v1028 = vsel %vm1027, 1, 0
    %v1029 = vcvt.s32.f32 %v1028
    %v1030 = vpack.c.bf16 %v1029, %v1029
    %v1031 = vld [vmem:[#allocation2 + $0x180] sm:$0xf]
    %v1032 = vld [vmem:[#allocation2 + $0x184] sm:$0xf]
    %v1033 = vld [vmem:[#allocation2 + $0x188] sm:$0xf]
    %v1034 = vld [vmem:[#allocation2 + $0x18c] sm:$0xf]
    %v1035 = vld [vmem:[#allocation2 + $0x190] sm:$0xf]
    %v1036 = vld [vmem:[#allocation2 + $0x194] sm:$0xf]
    %v1037 = vld [vmem:[#allocation2 + $0x198] sm:$0xf]
    %v1038 = vld [vmem:[#allocation2 + $0x19c] sm:$0xf]
    %v1047 = vunpack.c.l.b16 %v1031
    %v1048 = vunpack.c.l.b16 %v1032
    %v1049 = vunpack.c.l.b16 %v1033
    %v1050 = vunpack.c.l.b16 %v1034
    %v1051 = vunpack.c.l.b16 %v1035
    %v1052 = vunpack.c.l.b16 %v1036
    %v1053 = vunpack.c.l.b16 %v1037
    %v1054 = vunpack.c.l.b16 %v1038
    %v1055 = vpack.c.b16 %v1048, %v1047
    %v1056 = vpack.c.b16 %v1050, %v1049
    %v1057 = vpack.c.b16 %v1052, %v1051
    %v1058 = vpack.c.b16 %v1054, %v1053
    %v1064 = vsel %vm83, %v1030, 0
    %1066 = vmatprep.subr.bf16.mxu0 0
    %1067 = vmatpush1.bf16.msra.mxu0 0
    %1068 = vmatprep.subr.bf16.mxu0 0
    %1069 = vmatpush1.bf16.msra.mxu0 0
    %1070 = vmatprep.subr.bf16.mxu0 0
    %1071 = vmatpush1.bf16.msra.mxu0 0
    %1072 = vmatprep.subr.bf16.mxu0 0
    %1073 = vmatpush1.bf16.msra.mxu0 0
    %1074 = vmatprep.subr.bf16.mxu0 0
    %1075 = vmatpush1.bf16.msra.mxu0 %v1058
    %1076 = vmatprep.subr.bf16.mxu0 0
    %1077 = vmatpush1.bf16.msra.mxu0 %v1057
    %1078 = vmatprep.subr.bf16.mxu0 0
    %1079 = vmatpush1.bf16.msra.mxu0 %v1056
    %1080 = vmatprep.subr.bf16.mxu0 0
    %1081 = vmatpush1.bf16.msra.mxu0 %v1055
    %1082 = vmatprep.subr.bf16.mxu0 0
    %1083 = vmatpush2.bf16.msra.mxu0 0
    %1084 = vmatprep.subr.bf16.mxu0 0
    %1085 = vmatpush2.bf16.msra.mxu0 0
    %1086 = vmatprep.subr.bf16.mxu0 0
    %1087 = vmatpush2.bf16.msra.mxu0 0
    %1088 = vmatprep.subr.bf16.mxu0 0
    %1089 = vmatpush2.bf16.msra.mxu0 0
    %1090 = vmatprep.subr.bf16.mxu0 0
    %1091 = vmatpush2.bf16.msra.mxu0 0
    %1092 = vmatprep.subr.bf16.mxu0 0
    %1093 = vmatpush2.bf16.msra.mxu0 0
    %1094 = vmatprep.subr.bf16.mxu0 0
    %1095 = vmatpush2.bf16.msra.mxu0 0
    %1096 = vmatprep.subr.bf16.mxu0 0
    %1097 = vmatpush2.bf16.msra.mxu0 0
    %1098 = vmatprep.mubr.bf16.mxu0 0
    %1099 = vmatmul.mubr.bf16.gmra.mxu0 %v1064
    %v1100 = vpop.f32.mrf.mxu0
    %v1101 = vadd.f32 0.0, %v1100
    %v1102 = vpop.f32.mrf.mxu0
    %v1103 = vpop.f32.mrf.mxu0
    %v1104 = vpop.f32.mrf.mxu0
    %1105 = vdwg.mxu0
    %v1106 = vadd.f32 %v1023, %v1101
    %1107 = vset.pattern.permute.xlu0 13
    %1108 = vperm.xlu0 %1107, %v26
    %v1109 = vpop.permute.xlu0 %1108
    %vm1110 = vcmp.eq.s32.totalorder %v1109, %v28
    %v1111 = vsel %vm1110, 1, 0
    %v1112 = vcvt.s32.f32 %v1111
    %v1113 = vpack.c.bf16 %v1112, %v1112
    %v1114 = vld [vmem:[#allocation2 + $0x1a0] sm:$0xf]
    %v1115 = vld [vmem:[#allocation2 + $0x1a4] sm:$0xf]
    %v1116 = vld [vmem:[#allocation2 + $0x1a8] sm:$0xf]
    %v1117 = vld [vmem:[#allocation2 + $0x1ac] sm:$0xf]
    %v1118 = vld [vmem:[#allocation2 + $0x1b0] sm:$0xf]
    %v1119 = vld [vmem:[#allocation2 + $0x1b4] sm:$0xf]
    %v1120 = vld [vmem:[#allocation2 + $0x1b8] sm:$0xf]
    %v1121 = vld [vmem:[#allocation2 + $0x1bc] sm:$0xf]
    %v1130 = vunpack.c.l.b16 %v1114
    %v1131 = vunpack.c.l.b16 %v1115
    %v1132 = vunpack.c.l.b16 %v1116
    %v1133 = vunpack.c.l.b16 %v1117
    %v1134 = vunpack.c.l.b16 %v1118
    %v1135 = vunpack.c.l.b16 %v1119
    %v1136 = vunpack.c.l.b16 %v1120
    %v1137 = vunpack.c.l.b16 %v1121
    %v1138 = vpack.c.b16 %v1131, %v1130
    %v1139 = vpack.c.b16 %v1133, %v1132
    %v1140 = vpack.c.b16 %v1135, %v1134
    %v1141 = vpack.c.b16 %v1137, %v1136
    %v1147 = vsel %vm83, %v1113, 0
    %1149 = vmatprep.subr.bf16.mxu0 0
    %1150 = vmatpush1.bf16.msra.mxu0 0
    %1151 = vmatprep.subr.bf16.mxu0 0
    %1152 = vmatpush1.bf16.msra.mxu0 0
    %1153 = vmatprep.subr.bf16.mxu0 0
    %1154 = vmatpush1.bf16.msra.mxu0 0
    %1155 = vmatprep.subr.bf16.mxu0 0
    %1156 = vmatpush1.bf16.msra.mxu0 0
    %1157 = vmatprep.subr.bf16.mxu0 0
    %1158 = vmatpush1.bf16.msra.mxu0 %v1141
    %1159 = vmatprep.subr.bf16.mxu0 0
    %1160 = vmatpush1.bf16.msra.mxu0 %v1140
    %1161 = vmatprep.subr.bf16.mxu0 0
    %1162 = vmatpush1.bf16.msra.mxu0 %v1139
    %1163 = vmatprep.subr.bf16.mxu0 0
    %1164 = vmatpush1.bf16.msra.mxu0 %v1138
    %1165 = vmatprep.subr.bf16.mxu0 0
    %1166 = vmatpush2.bf16.msra.mxu0 0
    %1167 = vmatprep.subr.bf16.mxu0 0
    %1168 = vmatpush2.bf16.msra.mxu0 0
    %1169 = vmatprep.subr.bf16.mxu0 0
    %1170 = vmatpush2.bf16.msra.mxu0 0
    %1171 = vmatprep.subr.bf16.mxu0 0
    %1172 = vmatpush2.bf16.msra.mxu0 0
    %1173 = vmatprep.subr.bf16.mxu0 0
    %1174 = vmatpush2.bf16.msra.mxu0 0
    %1175 = vmatprep.subr.bf16.mxu0 0
    %1176 = vmatpush2.bf16.msra.mxu0 0
    %1177 = vmatprep.subr.bf16.mxu0 0
    %1178 = vmatpush2.bf16.msra.mxu0 0
    %1179 = vmatprep.subr.bf16.mxu0 0
    %1180 = vmatpush2.bf16.msra.mxu0 0
    %1181 = vmatprep.mubr.bf16.mxu0 0
    %1182 = vmatmul.mubr.bf16.gmra.mxu0 %v1147
    %v1183 = vpop.f32.mrf.mxu0
    %v1184 = vadd.f32 0.0, %v1183
    %v1185 = vpop.f32.mrf.mxu0
    %v1186 = vpop.f32.mrf.mxu0
    %v1187 = vpop.f32.mrf.mxu0
    %1188 = vdwg.mxu0
    %v1189 = vadd.f32 %v1106, %v1184
    %1190 = vset.pattern.permute.xlu0 14
    %1191 = vperm.xlu0 %1190, %v26
    %v1192 = vpop.permute.xlu0 %1191
    %vm1193 = vcmp.eq.s32.totalorder %v1192, %v28
    %v1194 = vsel %vm1193, 1, 0
    %v1195 = vcvt.s32.f32 %v1194
    %v1196 = vpack.c.bf16 %v1195, %v1195
    %v1197 = vld [vmem:[#allocation2 + $0x1c0] sm:$0xf]
    %v1198 = vld [vmem:[#allocation2 + $0x1c4] sm:$0xf]
    %v1199 = vld [vmem:[#allocation2 + $0x1c8] sm:$0xf]
    %v1200 = vld [vmem:[#allocation2 + $0x1cc] sm:$0xf]
    %v1201 = vld [vmem:[#allocation2 + $0x1d0] sm:$0xf]
    %v1202 = vld [vmem:[#allocation2 + $0x1d4] sm:$0xf]
    %v1203 = vld [vmem:[#allocation2 + $0x1d8] sm:$0xf]
    %v1204 = vld [vmem:[#allocation2 + $0x1dc] sm:$0xf]
    %v1213 = vunpack.c.l.b16 %v1197
    %v1214 = vunpack.c.l.b16 %v1198
    %v1215 = vunpack.c.l.b16 %v1199
    %v1216 = vunpack.c.l.b16 %v1200
    %v1217 = vunpack.c.l.b16 %v1201
    %v1218 = vunpack.c.l.b16 %v1202
    %v1219 = vunpack.c.l.b16 %v1203
    %v1220 = vunpack.c.l.b16 %v1204
    %v1221 = vpack.c.b16 %v1214, %v1213
    %v1222 = vpack.c.b16 %v1216, %v1215
    %v1223 = vpack.c.b16 %v1218, %v1217
    %v1224 = vpack.c.b16 %v1220, %v1219
    %v1230 = vsel %vm83, %v1196, 0
    %1232 = vmatprep.subr.bf16.mxu0 0
    %1233 = vmatpush1.bf16.msra.mxu0 0
    %1234 = vmatprep.subr.bf16.mxu0 0
    %1235 = vmatpush1.bf16.msra.mxu0 0
    %1236 = vmatprep.subr.bf16.mxu0 0
    %1237 = vmatpush1.bf16.msra.mxu0 0
    %1238 = vmatprep.subr.bf16.mxu0 0
    %1239 = vmatpush1.bf16.msra.mxu0 0
    %1240 = vmatprep.subr.bf16.mxu0 0
    %1241 = vmatpush1.bf16.msra.mxu0 %v1224
    %1242 = vmatprep.subr.bf16.mxu0 0
    %1243 = vmatpush1.bf16.msra.mxu0 %v1223
    %1244 = vmatprep.subr.bf16.mxu0 0
    %1245 = vmatpush1.bf16.msra.mxu0 %v1222
    %1246 = vmatprep.subr.bf16.mxu0 0
    %1247 = vmatpush1.bf16.msra.mxu0 %v1221
    %1248 = vmatprep.subr.bf16.mxu0 0
    %1249 = vmatpush2.bf16.msra.mxu0 0
    %1250 = vmatprep.subr.bf16.mxu0 0
    %1251 = vmatpush2.bf16.msra.mxu0 0
    %1252 = vmatprep.subr.bf16.mxu0 0
    %1253 = vmatpush2.bf16.msra.mxu0 0
    %1254 = vmatprep.subr.bf16.mxu0 0
    %1255 = vmatpush2.bf16.msra.mxu0 0
    %1256 = vmatprep.subr.bf16.mxu0 0
    %1257 = vmatpush2.bf16.msra.mxu0 0
    %1258 = vmatprep.subr.bf16.mxu0 0
    %1259 = vmatpush2.bf16.msra.mxu0 0
    %1260 = vmatprep.subr.bf16.mxu0 0
    %1261 = vmatpush2.bf16.msra.mxu0 0
    %1262 = vmatprep.subr.bf16.mxu0 0
    %1263 = vmatpush2.bf16.msra.mxu0 0
    %1264 = vmatprep.mubr.bf16.mxu0 0
    %1265 = vmatmul.mubr.bf16.gmra.mxu0 %v1230
    %v1266 = vpop.f32.mrf.mxu0
    %v1267 = vadd.f32 0.0, %v1266
    %v1268 = vpop.f32.mrf.mxu0
    %v1269 = vpop.f32.mrf.mxu0
    %v1270 = vpop.f32.mrf.mxu0
    %1271 = vdwg.mxu0
    %v1272 = vadd.f32 %v1189, %v1267
    %1273 = vset.pattern.permute.xlu0 15
    %1274 = vperm.xlu0 %1273, %v26
    %v1275 = vpop.permute.xlu0 %1274
    %vm1276 = vcmp.eq.s32.totalorder %v1275, %v28
    %v1277 = vsel %vm1276, 1, 0
    %v1278 = vcvt.s32.f32 %v1277
    %v1279 = vpack.c.bf16 %v1278, %v1278
    %v1280 = vld [vmem:[#allocation2 + $0x1e0] sm:$0xf]
    %v1281 = vld [vmem:[#allocation2 + $0x1e4] sm:$0xf]
    %v1282 = vld [vmem:[#allocation2 + $0x1e8] sm:$0xf]
    %v1283 = vld [vmem:[#allocation2 + $0x1ec] sm:$0xf]
    %v1284 = vld [vmem:[#allocation2 + $0x1f0] sm:$0xf]
    %v1285 = vld [vmem:[#allocation2 + $0x1f4] sm:$0xf]
    %v1286 = vld [vmem:[#allocation2 + $0x1f8] sm:$0xf]
    %v1287 = vld [vmem:[#allocation2 + $0x1fc] sm:$0xf]
    %v1296 = vunpack.c.l.b16 %v1280
    %v1297 = vunpack.c.l.b16 %v1281
    %v1298 = vunpack.c.l.b16 %v1282
    %v1299 = vunpack.c.l.b16 %v1283
    %v1300 = vunpack.c.l.b16 %v1284
    %v1301 = vunpack.c.l.b16 %v1285
    %v1302 = vunpack.c.l.b16 %v1286
    %v1303 = vunpack.c.l.b16 %v1287
    %v1304 = vpack.c.b16 %v1297, %v1296
    %v1305 = vpack.c.b16 %v1299, %v1298
    %v1306 = vpack.c.b16 %v1301, %v1300
    %v1307 = vpack.c.b16 %v1303, %v1302
    %v1313 = vsel %vm83, %v1279, 0
    %1315 = vmatprep.subr.bf16.mxu0 0
    %1316 = vmatpush1.bf16.msra.mxu0 0
    %1317 = vmatprep.subr.bf16.mxu0 0
    %1318 = vmatpush1.bf16.msra.mxu0 0
    %1319 = vmatprep.subr.bf16.mxu0 0
    %1320 = vmatpush1.bf16.msra.mxu0 0
    %1321 = vmatprep.subr.bf16.mxu0 0
    %1322 = vmatpush1.bf16.msra.mxu0 0
    %1323 = vmatprep.subr.bf16.mxu0 0
    %1324 = vmatpush1.bf16.msra.mxu0 %v1307
    %1325 = vmatprep.subr.bf16.mxu0 0
    %1326 = vmatpush1.bf16.msra.mxu0 %v1306
    %1327 = vmatprep.subr.bf16.mxu0 0
    %1328 = vmatpush1.bf16.msra.mxu0 %v1305
    %1329 = vmatprep.subr.bf16.mxu0 0
    %1330 = vmatpush1.bf16.msra.mxu0 %v1304
    %1331 = vmatprep.subr.bf16.mxu0 0
    %1332 = vmatpush2.bf16.msra.mxu0 0
    %1333 = vmatprep.subr.bf16.mxu0 0
    %1334 = vmatpush2.bf16.msra.mxu0 0
    %1335 = vmatprep.subr.bf16.mxu0 0
    %1336 = vmatpush2.bf16.msra.mxu0 0
    %1337 = vmatprep.subr.bf16.mxu0 0
    %1338 = vmatpush2.bf16.msra.mxu0 0
    %1339 = vmatprep.subr.bf16.mxu0 0
    %1340 = vmatpush2.bf16.msra.mxu0 0
    %1341 = vmatprep.subr.bf16.mxu0 0
    %1342 = vmatpush2.bf16.msra.mxu0 0
    %1343 = vmatprep.subr.bf16.mxu0 0
    %1344 = vmatpush2.bf16.msra.mxu0 0
    %1345 = vmatprep.subr.bf16.mxu0 0
    %1346 = vmatpush2.bf16.msra.mxu0 0
    %1347 = vmatprep.mubr.bf16.mxu0 0
    %1348 = vmatmul.mubr.bf16.gmra.mxu0 %v1313
    %v1349 = vpop.f32.mrf.mxu0
    %v1350 = vadd.f32 0.0, %v1349
    %v1351 = vpop.f32.mrf.mxu0
    %v1352 = vpop.f32.mrf.mxu0
    %v1353 = vpop.f32.mrf.mxu0
    %1354 = vdwg.mxu0
    %v1355 = vadd.f32 %v1272, %v1350
    %v1356 = vld [vmem:[#allocation2 + $0x240] sm:$0x1]
    %v1357 = vunpack.c.l.bf16 %v1356
    %v1358 = vlaneseq
    %v1359 = vshrl.u32 %v1358, 7
    %v1360 = vsub.s32 0, %v1359
    %v1361 = vrot.slane %v1357, %v1360
    %v1362 = vadd.f32 %v1355, %v1361
    %v1363 = vmax.f32 %v1362, 0.0
    %v1364 = vld [vmem:[#allocation2 + $0x200] sm:$0xf]
    %v1365 = vld [vmem:[#allocation2 + $0x204] sm:$0xf]
    %v1366 = vld [vmem:[#allocation2 + $0x208] sm:$0xf]
    %v1367 = vld [vmem:[#allocation2 + $0x20c] sm:$0xf]
    %v1368 = vld [vmem:[#allocation2 + $0x210] sm:$0xf]
    %v1369 = vld [vmem:[#allocation2 + $0x214] sm:$0xf]
    %v1370 = vld [vmem:[#allocation2 + $0x218] sm:$0xf]
    %v1371 = vld [vmem:[#allocation2 + $0x21c] sm:$0xf]
    %v1372 = vld [vmem:[#allocation2 + $0x220] sm:$0xf]
    %v1373 = vld [vmem:[#allocation2 + $0x224] sm:$0xf]
    %v1374 = vld [vmem:[#allocation2 + $0x228] sm:$0xf]
    %v1375 = vld [vmem:[#allocation2 + $0x22c] sm:$0xf]
    %v1376 = vld [vmem:[#allocation2 + $0x230] sm:$0xf]
    %v1377 = vld [vmem:[#allocation2 + $0x234] sm:$0xf]
    %v1378 = vld [vmem:[#allocation2 + $0x238] sm:$0xf]
    %v1379 = vld [vmem:[#allocation2 + $0x23c] sm:$0xf]
    %v1380 = vpack.c.bf16 %v1363, %v1363
    %v1381 = vld [vmem:[#allocation2 + $0x248] sm:$0x1]
    %v1382 = vunpack.c.l.bf16 %v1381
    %v1383 = vlaneseq
    %v1384 = vshrl.u32 %v1383, 7
    %v1385 = vsub.s32 0, %v1384
    %v1386 = vrot.slane %v1382, %v1385
    %v1403 = vunpack.c.l.b16 %v1364
    %v1404 = vunpack.c.l.b16 %v1365
    %v1405 = vunpack.c.l.b16 %v1366
    %v1406 = vunpack.c.l.b16 %v1367
    %v1407 = vunpack.c.l.b16 %v1368
    %v1408 = vunpack.c.l.b16 %v1369
    %v1409 = vunpack.c.l.b16 %v1370
    %v1410 = vunpack.c.l.b16 %v1371
    %v1411 = vunpack.c.l.b16 %v1372
    %v1412 = vunpack.c.l.b16 %v1373
    %v1413 = vunpack.c.l.b16 %v1374
    %v1414 = vunpack.c.l.b16 %v1375
    %v1415 = vunpack.c.l.b16 %v1376
    %v1416 = vunpack.c.l.b16 %v1377
    %v1417 = vunpack.c.l.b16 %v1378
    %v1418 = vunpack.c.l.b16 %v1379
    %v1419 = vpack.c.b16 %v1404, %v1403
    %v1420 = vpack.c.b16 %v1406, %v1405
    %v1421 = vpack.c.b16 %v1408, %v1407
    %v1422 = vpack.c.b16 %v1410, %v1409
    %v1423 = vpack.c.b16 %v1412, %v1411
    %v1424 = vpack.c.b16 %v1414, %v1413
    %v1425 = vpack.c.b16 %v1416, %v1415
    %v1426 = vpack.c.b16 %v1418, %v1417
    %1435 = vmatprep.subr.bf16.mxu0 0
    %1436 = vmatpush1.bf16.msra.mxu0 %v1426
    %1437 = vmatprep.subr.bf16.mxu0 0
    %1438 = vmatpush1.bf16.msra.mxu0 %v1425
    %1439 = vmatprep.subr.bf16.mxu0 0
    %1440 = vmatpush1.bf16.msra.mxu0 %v1424
    %1441 = vmatprep.subr.bf16.mxu0 0
    %1442 = vmatpush1.bf16.msra.mxu0 %v1423
    %1443 = vmatprep.subr.bf16.mxu0 0
    %1444 = vmatpush1.bf16.msra.mxu0 %v1422
    %1445 = vmatprep.subr.bf16.mxu0 0
    %1446 = vmatpush1.bf16.msra.mxu0 %v1421
    %1447 = vmatprep.subr.bf16.mxu0 0
    %1448 = vmatpush1.bf16.msra.mxu0 %v1420
    %1449 = vmatprep.subr.bf16.mxu0 0
    %1450 = vmatpush1.bf16.msra.mxu0 %v1419
    %1451 = vmatprep.subr.bf16.mxu0 0
    %1452 = vmatpush2.bf16.msra.mxu0 0
    %1453 = vmatprep.subr.bf16.mxu0 0
    %1454 = vmatpush2.bf16.msra.mxu0 0
    %1455 = vmatprep.subr.bf16.mxu0 0
    %1456 = vmatpush2.bf16.msra.mxu0 0
    %1457 = vmatprep.subr.bf16.mxu0 0
    %1458 = vmatpush2.bf16.msra.mxu0 0
    %1459 = vmatprep.subr.bf16.mxu0 0
    %1460 = vmatpush2.bf16.msra.mxu0 0
    %1461 = vmatprep.subr.bf16.mxu0 0
    %1462 = vmatpush2.bf16.msra.mxu0 0
    %1463 = vmatprep.subr.bf16.mxu0 0
    %1464 = vmatpush2.bf16.msra.mxu0 0
    %1465 = vmatprep.subr.bf16.mxu0 0
    %1466 = vmatpush2.bf16.msra.mxu0 0
    %1467 = vmatprep.mubr.bf16.mxu0 0
    %1468 = vmatmul.mubr.bf16.gmra.mxu0 %v1380
    %v1469 = vpop.f32.mrf.mxu0
    %v1470 = vadd.f32 %v1386, %v1469
    %v1471 = vpop.f32.mrf.mxu0
    %v1472 = vpop.f32.mrf.mxu0
    %v1473 = vpop.f32.mrf.mxu0
    %1474 = vdwg.mxu0
    %1475 = vst [vmem:[%s2] sm:$0xff] %v1470
    // Predicated region
    $region14: #{textcnn_forward.1} parent=1 // pred_check
      _
    $region15: #{textcnn_forward.1} parent=1 // pred_check_branch
      %1477 = sbr.rel (0) target = $region17
    $region16: #{textcnn_forward.1} parent=1 // pred_region
      _
    $region17: #{textcnn_forward.1} parent=1 // pred_fallthru
      _
    // Predicated region
    $region18: #{textcnn_forward.1} parent=1 // pred_check
      _
    $region19: #{textcnn_forward.1} parent=1 // pred_check_branch
      %1479 = sbr.rel (0) target = $region21
    $region20: #{textcnn_forward.1} parent=1 // pred_region
      _
    $region21: #{textcnn_forward.1} parent=1 // pred_fallthru
      _
    %1480 = vsyncpa [#allocation3], 1

</llo_original>
